<compile_context>
chip_gen: v7x
topology: tpu7x:2x2x1
jax: 0.10.0
libtpu: 0.0.40
codegen_flags: <defaults>
</compile_context>

<pallas_src>
import functools
import numpy as np
import jax
import jax.numpy as jnp
from jax.experimental import pallas as pl
from jax.experimental.pallas import tpu as pltpu

DILATIONS = (6, 12, 18, 24)       # dilation_rates == padding_series in the reference
LANE = 128                        # channel padding target for lane-dense MXU output / stores


def _interp_matrix(n_out, n_in):
    """align_corners=True bilinear (1-D linear) interpolation matrix [n_out, n_in]."""
    A = np.zeros((n_out, n_in), dtype=np.float32)
    if n_out == 1 or n_in == 1:
        A[:, 0] = 1.0
        return A
    scale = (n_in - 1) / (n_out - 1)
    for o in range(n_out):
        s = o * scale
        i0 = min(int(np.floor(s)), n_in - 1)
        i1 = min(i0 + 1, n_in - 1)
        f = s - i0
        A[o, i0] += 1.0 - f
        A[o, i1] += f
    return A


def _interp_taps(n_out, n_in):
    """Per-output-row (src0, src1, frac) taps for align_corners=True linear interpolation."""
    if n_out == 1 or n_in == 1:
        return tuple((0, 0, 0.0) for _ in range(n_out))
    scale = (n_in - 1) / (n_out - 1)
    taps = []
    for o in range(n_out):
        s = o * scale
        i0 = min(int(np.floor(s)), n_in - 1)
        i1 = min(i0 + 1, n_in - 1)
        taps.append((i0, i1, float(s - i0)))
    return tuple(taps)


def aspp_upsample_kernel(feat_ref, wf_ref, b_ref, aw_ref, out_ref, x_ref, *,
                         H, W, Cin, Cpad, Hout, Wout, tap_offsets, h_taps):
    """One batch element: K-fused ASPP conv + bias, then separable bilinear upsample.

    feat_ref: [1, H, W, Cin]        bf16 feature map (unpadded; no zero-pad DMA'd from HBM)
    wf_ref:   [K, Cpad]             bf16 fused per-offset weights, K = n_offsets * Cin
    b_ref:    [1, Cpad]             f32 summed branch bias (channel-padded)
    aw_ref:   [Wout, W]             f32 1-D interpolation matrix along W
    out_ref:  [1, Hout, Wout, Cpad] f32 output block (lane-dense: Cpad = 128)
    x_ref:    [H, W, K]             f32 im2col scratch (zeros reproduce the conv's padding)
    """
    K = len(tap_offsets) * Cin

    # Zero the scratch each step (megacore-safe); regions no tap writes stay zero,
    # which is exactly the dilated conv's zero padding -- no padded map is materialized.
    x_ref[...] = jnp.zeros_like(x_ref)

    # Scatter each (merged) tap's valid window into its K-slice of the im2col scratch.
    # All slice bounds are static Python ints, computed from the compile-time shapes.
    for i, (dy, dx) in enumerate(tap_offsets):
        oy0, oy1 = max(0, -dy), min(H, H - dy)
        ox0, ox1 = max(0, -dx), min(W, W - dx)
        x_ref[oy0:oy1, ox0:ox1, i * Cin:(i + 1) * Cin] = (
            feat_ref[0, oy0 + dy:oy1 + dy, ox0 + dx:ox1 + dx, :].astype(jnp.float32))

    # Single K-fused MXU matmul for all 4 dilated branches: [H*W, K] x [K, Cpad],
    # bf16 operands, f32 accumulation.  (The leading-dim reshape is layout-preserving.)
    x2d = x_ref[...].reshape(H * W, K).astype(jnp.bfloat16)
    acc = jnp.dot(x2d, wf_ref[...], preferred_element_type=jnp.float32)
    acc = acc + b_ref[...]                                    # [H*W, Cpad], bias in f32 (VPU)

    # Separable bilinear upsample (align_corners=True), all in f32 (interp weights are exact).
    # 1) contract W with ONE batched matmul over the H source rows: [H, Wout, W] x [H, W, Cpad].
    acc3 = acc.reshape(H, W, Cpad)                            # leading-dim split, no relayout
    aw_b = jnp.broadcast_to(aw_ref[...], (H, Wout, W))
    t = jax.lax.dot_general(aw_b, acc3,
                            dimension_numbers=(((2,), (1,)), ((0,), (0,))),
                            preferred_element_type=jnp.float32)     # [H, Wout, Cpad]
    # 2) contract H: every output row is a 2-tap convex combination (taps baked at trace time).
    for ho, (h0, h1, f) in enumerate(h_taps):
        out_ref[0, ho] = (1.0 - f) * t[h0] + f * t[h1]        # [Wout, Cpad] lane-dense store


def deeplab_head_pallas(feat_nhwc, w_aspp, b_aspp, h_out, w_out):
    """ASPP_V2 + bilinear upsample.  feat_nhwc: [N, H, W, Cin] -> [N, h_out, w_out, Cout]."""
    N, H, W, Cin = feat_nhwc.shape
    Cout = w_aspp.shape[1]
    Cpad = ((Cout + LANE - 1) // LANE) * LANE

    # Prune taps whose dilated offset never overlaps the feature map (they only read padding)
    # and MERGE taps (across branches) that share the same dilated offset -- those multiply
    # the exact same input slab, so their weights are summed at trace time.  This shrinks K
    # (im2col width and matmul depth) with no change in semantics.
    offset_taps = {}
    for b, d in enumerate(DILATIONS):
        for ky in range(3):
            for kx in range(3):
                dy, dx = (ky - 1) * d, (kx - 1) * d
                if max(0, -dy) < min(H, H - dy) and max(0, -dx) < min(W, W - dx):
                    offset_taps.setdefault((dy, dx), []).append((b, ky, kx))
    tap_offsets = tuple(offset_taps.keys())
    K = len(tap_offsets) * Cin

    # Fused per-offset weights [K, Cpad] (channels padded to 128 -> lane-dense MXU output).
    w_cols = []
    for taps in offset_taps.values():
        wcol = sum(jnp.transpose(w_aspp[b, :, :, ky, kx]) for (b, ky, kx) in taps)  # [Cin,Cout]
        w_cols.append(wcol)
    wf = jnp.concatenate(w_cols, axis=0)                              # [K, Cout] f32
    wf = jnp.pad(wf, ((0, 0), (0, Cpad - Cout))).astype(jnp.bfloat16)
    bias = jnp.pad(jnp.sum(b_aspp, axis=0), (0, Cpad - Cout))
    bias = bias.reshape(1, Cpad).astype(jnp.float32)

    A_w = jnp.asarray(_interp_matrix(w_out, W))                       # [Wout, W]
    h_taps = _interp_taps(h_out, H)

    kernel = functools.partial(
        aspp_upsample_kernel, H=H, W=W, Cin=Cin, Cpad=Cpad, Hout=h_out, Wout=w_out,
        tap_offsets=tap_offsets, h_taps=h_taps)

    # TODO(synk): at production DeepLab sizes (Cin~2048, 41x41 -> 321x321) add a spatial grid
    # axis with halo index maps and per-dilation K-fusion so per-step blocks fit v7x's 64 MiB
    # VMEM and both TensorCores are used at batch 1; also single-buffer the grid-invariant
    # weight/bias/A_w blocks.
    out = pl.pallas_call(
        kernel,
        out_shape=jax.ShapeDtypeStruct((N, h_out, w_out, Cpad), jnp.float32),
        grid_spec=pltpu.PrefetchScalarGridSpec(
            num_scalar_prefetch=0,
            grid=(N,),
            in_specs=[
                pl.BlockSpec((1, H, W, Cin), lambda n: (n, 0, 0, 0)),   # feature (bf16)
                pl.BlockSpec((K, Cpad), lambda n: (0, 0)),              # fused weights (bf16)
                pl.BlockSpec((1, Cpad), lambda n: (0, 0)),              # summed bias (f32)
                pl.BlockSpec((w_out, W), lambda n: (0, 0)),             # A_w (f32)
            ],
            out_specs=pl.BlockSpec((1, h_out, w_out, Cpad), lambda n: (n, 0, 0, 0)),
            scratch_shapes=[pltpu.VMEM((H, W, K), jnp.float32)],        # im2col scratch
        ),
        compiler_params=pltpu.CompilerParams(dimension_semantics=("parallel",)),
    )(feat_nhwc.astype(jnp.bfloat16), wf, bias, A_w)

    return out[..., :Cout]                                             # strip channel padding


def synthetic_backbone(x_nhwc, w_bb, b_bb):
    # TODO(synk): stand-in for the pretrained ResNet-101 backbone (glue, not the hot path).
    y = jax.lax.conv_general_dilated(
        x_nhwc, w_bb, window_strides=(2, 2), padding=((1, 1), (1, 1)),
        dimension_numbers=("NHWC", "HWIO", "NHWC"))
    return jax.nn.relu(y + b_bb)


def deeblab_forward(x_nchw, w_bb, b_bb, w_aspp, b_aspp):
    """Full forward pass. x_nchw: [N, 3, H, W] -> [N, num_classes, H, W] (PyTorch layout)."""
    N, _, Himg, Wimg = x_nchw.shape
    x_nhwc = jnp.transpose(x_nchw, (0, 2, 3, 1))
    feat = synthetic_backbone(x_nhwc, w_bb, b_bb)
    out_nhwc = deeplab_head_pallas(feat, w_aspp, b_aspp, Himg, Wimg)
    return jnp.transpose(out_nhwc, (0, 3, 1, 2))                       # back to NCHW


def reference_forward(x_nchw, w_bb, b_bb, w_aspp, b_aspp):
    """Plain-JAX f32 reference for a correctness check."""
    N, _, Himg, Wimg = x_nchw.shape
    x_nhwc = jnp.transpose(x_nchw, (0, 2, 3, 1))
    feat = synthetic_backbone(x_nhwc, w_bb, b_bb)
    out = 0.0
    for b, d in enumerate(DILATIONS):
        wb = jnp.transpose(w_aspp[b], (2, 3, 1, 0))   # [3,3,Cin,Cout] HWIO
        y = jax.lax.conv_general_dilated(
            feat, wb, window_strides=(1, 1), padding=((d, d), (d, d)),
            rhs_dilation=(d, d), dimension_numbers=("NHWC", "HWIO", "NHWC"))
        out = out + y + b_aspp[b]
    A_h = jnp.asarray(_interp_matrix(Himg, out.shape[1]))
    A_w = jnp.asarray(_interp_matrix(Wimg, out.shape[2]))
    up = jnp.einsum("Hh,nhwc->nHwc", A_h, out)
    up = jnp.einsum("Ww,nhwc->nhWc", A_w, up)
    return jnp.transpose(up, (0, 3, 1, 2))


if __name__ == "__main__":
    N, CIMG, HIMG, WIMG = 2, 3, 16, 16
    IN_DIM, NUM_CLASSES = 32, 8

    key = jax.random.PRNGKey(0)
    k0, k1, k2, k3, k4 = jax.random.split(key, 5)
    x = jax.random.normal(k0, (N, CIMG, HIMG, WIMG), jnp.float32)
    # synthetic backbone params (HWIO)
    w_bb = jax.random.normal(k1, (3, 3, CIMG, IN_DIM), jnp.float32) * np.sqrt(2.0 / (9 * CIMG))
    b_bb = jax.random.normal(k2, (IN_DIM,), jnp.float32) * 0.01
    # ASPP_V2 params: 4 branches of Conv2d(IN_DIM, NUM_CLASSES, 3, dilation=d, padding=d)
    w_aspp = jax.random.normal(k3, (len(DILATIONS), NUM_CLASSES, IN_DIM, 3, 3),
                               jnp.float32) * np.sqrt(2.0 / (9 * IN_DIM))
    b_aspp = jax.random.normal(k4, (len(DILATIONS), NUM_CLASSES), jnp.float32) * 0.01

    out = deeblab_forward(x, w_bb, b_bb, w_aspp, b_aspp)
    out = jax.block_until_ready(out)
    assert out.shape == (N, NUM_CLASSES, HIMG, WIMG), out.shape

    ref = jax.block_until_ready(reference_forward(x, w_bb, b_bb, w_aspp, b_aspp))
    # Tolerance loosened vs a pure-f32 version: the conv matmul feeds bf16 operands to the
    # MXU (f32 accumulation); the upsample stays in f32.
    np.testing.assert_allclose(np.asarray(out), np.asarray(ref), rtol=5e-2, atol=5e-2)

    print("KERNEL_OK")
</pallas_src>

<mosaic_0001>
module attributes {stable_mosaic.version = 11 : i64} {
  func.func @aspp_upsample_kernel(%arg0: i32, %arg1: memref<1x8x8x32xbf16, #tpu.memory_space<vmem>>, %arg2: memref<288x128xbf16, #tpu.memory_space<vmem>>, %arg3: memref<1x128xf32, #tpu.memory_space<vmem>>, %arg4: memref<16x8xf32, #tpu.memory_space<vmem>>, %arg5: memref<1x16x16x128xf32, #tpu.memory_space<vmem>>, %arg6: memref<8x8x288xf32, #tpu.memory_space<vmem>>) attributes {dimension_semantics = [#tpu.dimension_semantics<parallel>], iteration_bounds = array<i64: 2>, scalar_prefetch = 0 : i64, scratch_operands = 1 : i64, tpu.core_type = #tpu.core_type<tc>, window_params = [{transform_indices = @transform_0, window_bounds = array<i64: 1, 8, 8, 32>}, {pipeline_mode = #tpu.pipeline_mode<synchronous>, transform_indices = @transform_1, window_bounds = array<i64: 288, 128>}, {pipeline_mode = #tpu.pipeline_mode<synchronous>, transform_indices = @transform_2, window_bounds = array<i64: 1, 128>}, {pipeline_mode = #tpu.pipeline_mode<synchronous>, transform_indices = @transform_3, window_bounds = array<i64: 16, 8>}, {transform_indices = @transform_4, window_bounds = array<i64: 1, 16, 16, 128>}]} {
    %cst = arith.constant 0.000000e+00 : f32
    %0 = vector.broadcast %cst : f32 to vector<8x8x288xf32>
    %c0 = arith.constant 0 : index
    %c0_0 = arith.constant 0 : index
    %c0_1 = arith.constant 0 : index
    %1 = vector.load %arg6[%c0, %c0_0, %c0_1] : memref<8x8x288xf32, #tpu.memory_space<vmem>>, vector<8x8x288xf32>
    tpu.vector_store %arg6[%c0, %c0_0, %c0_1], %0 {strides = array<i32>} : memref<8x8x288xf32, #tpu.memory_space<vmem>>, vector<8x8x288xf32>,
    %c0_2 = arith.constant 0 : index
    %c0_3 = arith.constant 0 : index
    %c0_4 = arith.constant 0 : index
    %c0_5 = arith.constant 0 : index
    %2 = vector.load %arg1[%c0_2, %c0_3, %c0_4, %c0_5] : memref<1x8x8x32xbf16, #tpu.memory_space<vmem>>, vector<1x2x2x32xbf16>
    %3 = vector.shape_cast %2 : vector<1x2x2x32xbf16> to vector<2x2x32xbf16>
    %4 = arith.extf %3 : vector<2x2x32xbf16> to vector<2x2x32xf32>
    %c6 = arith.constant 6 : index
    %c6_6 = arith.constant 6 : index
    %c0_7 = arith.constant 0 : index
    %5 = vector.load %arg6[%c6, %c6_6, %c0_7] : memref<8x8x288xf32, #tpu.memory_space<vmem>>, vector<2x2x32xf32>
    tpu.vector_store %arg6[%c6, %c6_6, %c0_7], %4 {strides = array<i32>} : memref<8x8x288xf32, #tpu.memory_space<vmem>>, vector<2x2x32xf32>,
    %c0_8 = arith.constant 0 : index
    %c0_9 = arith.constant 0 : index
    %c0_10 = arith.constant 0 : index
    %c0_11 = arith.constant 0 : index
    %6 = vector.load %arg1[%c0_8, %c0_9, %c0_10, %c0_11] : memref<1x8x8x32xbf16, #tpu.memory_space<vmem>>, vector<1x2x8x32xbf16>
    %7 = vector.shape_cast %6 : vector<1x2x8x32xbf16> to vector<2x8x32xbf16>
    %8 = arith.extf %7 : vector<2x8x32xbf16> to vector<2x8x32xf32>
    %c6_12 = arith.constant 6 : index
    %c0_13 = arith.constant 0 : index
    %c32 = arith.constant 32 : index
    %9 = vector.load %arg6[%c6_12, %c0_13, %c32] : memref<8x8x288xf32, #tpu.memory_space<vmem>>, vector<2x8x32xf32>
    tpu.vector_store %arg6[%c6_12, %c0_13, %c32], %8 {strides = array<i32>} : memref<8x8x288xf32, #tpu.memory_space<vmem>>, vector<2x8x32xf32>,
    %c0_14 = arith.constant 0 : index
    %c0_15 = arith.constant 0 : index
    %c6_16 = arith.constant 6 : index
    %c0_17 = arith.constant 0 : index
    %10 = vector.load %arg1[%c0_14, %c0_15, %c6_16, %c0_17] : memref<1x8x8x32xbf16, #tpu.memory_space<vmem>>, vector<1x2x2x32xbf16>
    %11 = vector.shape_cast %10 : vector<1x2x2x32xbf16> to vector<2x2x32xbf16>
    %12 = arith.extf %11 : vector<2x2x32xbf16> to vector<2x2x32xf32>
    %c6_18 = arith.constant 6 : index
    %c0_19 = arith.constant 0 : index
    %c64 = arith.constant 64 : index
    %13 = vector.load %arg6[%c6_18, %c0_19, %c64] : memref<8x8x288xf32, #tpu.memory_space<vmem>>, vector<2x2x32xf32>
    tpu.vector_store %arg6[%c6_18, %c0_19, %c64], %12 {strides = array<i32>} : memref<8x8x288xf32, #tpu.memory_space<vmem>>, vector<2x2x32xf32>,
    %c0_20 = arith.constant 0 : index
    %c0_21 = arith.constant 0 : index
    %c0_22 = arith.constant 0 : index
    %c0_23 = arith.constant 0 : index
    %14 = vector.load %arg1[%c0_20, %c0_21, %c0_22, %c0_23] : memref<1x8x8x32xbf16, #tpu.memory_space<vmem>>, vector<1x8x2x32xbf16>
    %15 = vector.shape_cast %14 : vector<1x8x2x32xbf16> to vector<8x2x32xbf16>
    %16 = arith.extf %15 : vector<8x2x32xbf16> to vector<8x2x32xf32>
    %c0_24 = arith.constant 0 : index
    %c6_25 = arith.constant 6 : index
    %c96 = arith.constant 96 : index
    %17 = vector.load %arg6[%c0_24, %c6_25, %c96] : memref<8x8x288xf32, #tpu.memory_space<vmem>>, vector<8x2x32xf32>
    tpu.vector_store %arg6[%c0_24, %c6_25, %c96], %16 {strides = array<i32>} : memref<8x8x288xf32, #tpu.memory_space<vmem>>, vector<8x2x32xf32>,
    %c0_26 = arith.constant 0 : index
    %c0_27 = arith.constant 0 : index
    %c0_28 = arith.constant 0 : index
    %c0_29 = arith.constant 0 : index
    %18 = vector.load %arg1[%c0_26, %c0_27, %c0_28, %c0_29] : memref<1x8x8x32xbf16, #tpu.memory_space<vmem>>, vector<1x8x8x32xbf16>
    %19 = vector.shape_cast %18 : vector<1x8x8x32xbf16> to vector<8x8x32xbf16>
    %20 = arith.extf %19 : vector<8x8x32xbf16> to vector<8x8x32xf32>
    %c0_30 = arith.constant 0 : index
    %c0_31 = arith.constant 0 : index
    %c128 = arith.constant 128 : index
    %21 = vector.load %arg6[%c0_30, %c0_31, %c128] : memref<8x8x288xf32, #tpu.memory_space<vmem>>, vector<8x8x32xf32>
    tpu.vector_store %arg6[%c0_30, %c0_31, %c128], %20 {strides = array<i32>} : memref<8x8x288xf32, #tpu.memory_space<vmem>>, vector<8x8x32xf32>,
    %c0_32 = arith.constant 0 : index
    %c0_33 = arith.constant 0 : index
    %c6_34 = arith.constant 6 : index
    %c0_35 = arith.constant 0 : index
    %22 = vector.load %arg1[%c0_32, %c0_33, %c6_34, %c0_35] : memref<1x8x8x32xbf16, #tpu.memory_space<vmem>>, vector<1x8x2x32xbf16>
    %23 = vector.shape_cast %22 : vector<1x8x2x32xbf16> to vector<8x2x32xbf16>
    %24 = arith.extf %23 : vector<8x2x32xbf16> to vector<8x2x32xf32>
    %c0_36 = arith.constant 0 : index
    %c0_37 = arith.constant 0 : index
    %c160 = arith.constant 160 : index
    %25 = vector.load %arg6[%c0_36, %c0_37, %c160] : memref<8x8x288xf32, #tpu.memory_space<vmem>>, vector<8x2x32xf32>
    tpu.vector_store %arg6[%c0_36, %c0_37, %c160], %24 {strides = array<i32>} : memref<8x8x288xf32, #tpu.memory_space<vmem>>, vector<8x2x32xf32>,
    %c0_38 = arith.constant 0 : index
    %c6_39 = arith.constant 6 : index
    %c0_40 = arith.constant 0 : index
    %c0_41 = arith.constant 0 : index
    %26 = vector.load %arg1[%c0_38, %c6_39, %c0_40, %c0_41] : memref<1x8x8x32xbf16, #tpu.memory_space<vmem>>, vector<1x2x2x32xbf16>
    %27 = vector.shape_cast %26 : vector<1x2x2x32xbf16> to vector<2x2x32xbf16>
    %28 = arith.extf %27 : vector<2x2x32xbf16> to vector<2x2x32xf32>
    %c0_42 = arith.constant 0 : index
    %c6_43 = arith.constant 6 : index
    %c192 = arith.constant 192 : index
    %29 = vector.load %arg6[%c0_42, %c6_43, %c192] : memref<8x8x288xf32, #tpu.memory_space<vmem>>, vector<2x2x32xf32>
    tpu.vector_store %arg6[%c0_42, %c6_43, %c192], %28 {strides = array<i32>} : memref<8x8x288xf32, #tpu.memory_space<vmem>>, vector<2x2x32xf32>,
    %c0_44 = arith.constant 0 : index
    %c6_45 = arith.constant 6 : index
    %c0_46 = arith.constant 0 : index
    %c0_47 = arith.constant 0 : index
    %30 = vector.load %arg1[%c0_44, %c6_45, %c0_46, %c0_47] : memref<1x8x8x32xbf16, #tpu.memory_space<vmem>>, vector<1x2x8x32xbf16>
    %31 = vector.shape_cast %30 : vector<1x2x8x32xbf16> to vector<2x8x32xbf16>
    %32 = arith.extf %31 : vector<2x8x32xbf16> to vector<2x8x32xf32>
    %c0_48 = arith.constant 0 : index
    %c0_49 = arith.constant 0 : index
    %c224 = arith.constant 224 : index
    %33 = vector.load %arg6[%c0_48, %c0_49, %c224] : memref<8x8x288xf32, #tpu.memory_space<vmem>>, vector<2x8x32xf32>
    tpu.vector_store %arg6[%c0_48, %c0_49, %c224], %32 {strides = array<i32>} : memref<8x8x288xf32, #tpu.memory_space<vmem>>, vector<2x8x32xf32>,
    %c0_50 = arith.constant 0 : index
    %c6_51 = arith.constant 6 : index
    %c6_52 = arith.constant 6 : index
    %c0_53 = arith.constant 0 : index
    %34 = vector.load %arg1[%c0_50, %c6_51, %c6_52, %c0_53] : memref<1x8x8x32xbf16, #tpu.memory_space<vmem>>, vector<1x2x2x32xbf16>
    %35 = vector.shape_cast %34 : vector<1x2x2x32xbf16> to vector<2x2x32xbf16>
    %36 = arith.extf %35 : vector<2x2x32xbf16> to vector<2x2x32xf32>
    %c0_54 = arith.constant 0 : index
    %c0_55 = arith.constant 0 : index
    %c256 = arith.constant 256 : index
    %37 = vector.load %arg6[%c0_54, %c0_55, %c256] : memref<8x8x288xf32, #tpu.memory_space<vmem>>, vector<2x2x32xf32>
    tpu.vector_store %arg6[%c0_54, %c0_55, %c256], %36 {strides = array<i32>} : memref<8x8x288xf32, #tpu.memory_space<vmem>>, vector<2x2x32xf32>,
    %c0_56 = arith.constant 0 : index
    %c0_57 = arith.constant 0 : index
    %c0_58 = arith.constant 0 : index
    %38 = vector.load %arg6[%c0_56, %c0_57, %c0_58] : memref<8x8x288xf32, #tpu.memory_space<vmem>>, vector<8x8x288xf32>
    %39 = vector.shape_cast %38 : vector<8x8x288xf32> to vector<64x288xf32>
    %40 = arith.truncf %39 : vector<64x288xf32> to vector<64x288xbf16>
    %c0_59 = arith.constant 0 : index
    %c0_60 = arith.constant 0 : index
    %41 = vector.load %arg2[%c0_59, %c0_60] : memref<288x128xbf16, #tpu.memory_space<vmem>>, vector<288x128xbf16>
    %cst_61 = arith.constant dense<0.000000e+00> : vector<64x128xf32>
    %42 = tpu.matmul %40, %41, %cst_61 {dimension_numbers = #tpu.dot_dimension_numbers<[1], [0], [0], [1], [0, 0, 1, 1], [], []>} : vector<64x288xbf16>, vector<288x128xbf16>, vector<64x128xf32> -> vector<64x128xf32>
    %c0_62 = arith.constant 0 : index
    %c0_63 = arith.constant 0 : index
    %43 = vector.load %arg3[%c0_62, %c0_63] : memref<1x128xf32, #tpu.memory_space<vmem>>, vector<1x128xf32>
    %44 = vector.broadcast %43 : vector<1x128xf32> to vector<64x128xf32>
    %45 = arith.addf %42, %44 : vector<64x128xf32>
    %46 = vector.shape_cast %45 : vector<64x128xf32> to vector<8x8x128xf32>
    %c0_64 = arith.constant 0 : index
    %c0_65 = arith.constant 0 : index
    %47 = vector.load %arg4[%c0_64, %c0_65] : memref<16x8xf32, #tpu.memory_space<vmem>>, vector<16x8xf32>
    %48 = vector.shape_cast %47 : vector<16x8xf32> to vector<1x16x8xf32>
    %49 = vector.broadcast %48 : vector<1x16x8xf32> to vector<8x16x8xf32>
    %cst_66 = arith.constant dense<0.000000e+00> : vector<8x16x128xf32>
    %50 = tpu.matmul %49, %46, %cst_66 {dimension_numbers = #tpu.dot_dimension_numbers<[2], [1], [1], [2], [0, 0, 0, 1, 1, 2], [0], [0]>} : vector<8x16x8xf32>, vector<8x8x128xf32>, vector<8x16x128xf32> -> vector<8x16x128xf32>
    %51 = vector.extract_strided_slice %50 {offsets = [0, 0, 0], sizes = [1, 16, 128], strides = [1, 1, 1]} : vector<8x16x128xf32> to vector<1x16x128xf32>
    %52 = vector.shape_cast %51 : vector<1x16x128xf32> to vector<16x128xf32>
    %cst_67 = arith.constant 1.000000e+00 : f32
    %53 = vector.broadcast %cst_67 : f32 to vector<16x128xf32>
    %54 = arith.mulf %53, %52 : vector<16x128xf32>
    %55 = vector.extract_strided_slice %50 {offsets = [1, 0, 0], sizes = [1, 16, 128], strides = [1, 1, 1]} : vector<8x16x128xf32> to vector<1x16x128xf32>
    %56 = vector.shape_cast %55 : vector<1x16x128xf32> to vector<16x128xf32>
    %cst_68 = arith.constant 0.000000e+00 : f32
    %57 = vector.broadcast %cst_68 : f32 to vector<16x128xf32>
    %58 = arith.mulf %57, %56 : vector<16x128xf32>
    %59 = arith.addf %54, %58 : vector<16x128xf32>
    %c0_69 = arith.constant 0 : index
    %c0_70 = arith.constant 0 : index
    %c0_71 = arith.constant 0 : index
    %c0_72 = arith.constant 0 : index
    %60 = vector.load %arg5[%c0_69, %c0_70, %c0_71, %c0_72] : memref<1x16x16x128xf32, #tpu.memory_space<vmem>>, vector<1x1x16x128xf32>
    %61 = vector.shape_cast %60 : vector<1x1x16x128xf32> to vector<16x128xf32>
    %62 = vector.shape_cast %59 : vector<16x128xf32> to vector<1x1x16x128xf32>
    tpu.vector_store %arg5[%c0_69, %c0_70, %c0_71, %c0_72], %62 {strides = array<i32>} : memref<1x16x16x128xf32, #tpu.memory_space<vmem>>, vector<1x1x16x128xf32>,
    %63 = vector.extract_strided_slice %50 {offsets = [0, 0, 0], sizes = [1, 16, 128], strides = [1, 1, 1]} : vector<8x16x128xf32> to vector<1x16x128xf32>
    %64 = vector.shape_cast %63 : vector<1x16x128xf32> to vector<16x128xf32>
    %cst_73 = arith.constant 0.533333361 : f32
    %65 = vector.broadcast %cst_73 : f32 to vector<16x128xf32>
    %66 = arith.mulf %65, %64 : vector<16x128xf32>
    %67 = vector.extract_strided_slice %50 {offsets = [1, 0, 0], sizes = [1, 16, 128], strides = [1, 1, 1]} : vector<8x16x128xf32> to vector<1x16x128xf32>
    %68 = vector.shape_cast %67 : vector<1x16x128xf32> to vector<16x128xf32>
    %cst_74 = arith.constant 0.466666669 : f32
    %69 = vector.broadcast %cst_74 : f32 to vector<16x128xf32>
    %70 = arith.mulf %69, %68 : vector<16x128xf32>
    %71 = arith.addf %66, %70 : vector<16x128xf32>
    %c0_75 = arith.constant 0 : index
    %c1 = arith.constant 1 : index
    %c0_76 = arith.constant 0 : index
    %c0_77 = arith.constant 0 : index
    %72 = vector.load %arg5[%c0_75, %c1, %c0_76, %c0_77] : memref<1x16x16x128xf32, #tpu.memory_space<vmem>>, vector<1x1x16x128xf32>
    %73 = vector.shape_cast %72 : vector<1x1x16x128xf32> to vector<16x128xf32>
    %74 = vector.shape_cast %71 : vector<16x128xf32> to vector<1x1x16x128xf32>
    tpu.vector_store %arg5[%c0_75, %c1, %c0_76, %c0_77], %74 {strides = array<i32>} : memref<1x16x16x128xf32, #tpu.memory_space<vmem>>, vector<1x1x16x128xf32>,
    %75 = vector.extract_strided_slice %50 {offsets = [0, 0, 0], sizes = [1, 16, 128], strides = [1, 1, 1]} : vector<8x16x128xf32> to vector<1x16x128xf32>
    %76 = vector.shape_cast %75 : vector<1x16x128xf32> to vector<16x128xf32>
    %cst_78 = arith.constant 0.0666666701 : f32
    %77 = vector.broadcast %cst_78 : f32 to vector<16x128xf32>
    %78 = arith.mulf %77, %76 : vector<16x128xf32>
    %79 = vector.extract_strided_slice %50 {offsets = [1, 0, 0], sizes = [1, 16, 128], strides = [1, 1, 1]} : vector<8x16x128xf32> to vector<1x16x128xf32>
    %80 = vector.shape_cast %79 : vector<1x16x128xf32> to vector<16x128xf32>
    %cst_79 = arith.constant 0.933333337 : f32
    %81 = vector.broadcast %cst_79 : f32 to vector<16x128xf32>
    %82 = arith.mulf %81, %80 : vector<16x128xf32>
    %83 = arith.addf %78, %82 : vector<16x128xf32>
    %c0_80 = arith.constant 0 : index
    %c2 = arith.constant 2 : index
    %c0_81 = arith.constant 0 : index
    %c0_82 = arith.constant 0 : index
    %84 = vector.load %arg5[%c0_80, %c2, %c0_81, %c0_82] : memref<1x16x16x128xf32, #tpu.memory_space<vmem>>, vector<1x1x16x128xf32>
    %85 = vector.shape_cast %84 : vector<1x1x16x128xf32> to vector<16x128xf32>
    %86 = vector.shape_cast %83 : vector<16x128xf32> to vector<1x1x16x128xf32>
    tpu.vector_store %arg5[%c0_80, %c2, %c0_81, %c0_82], %86 {strides = array<i32>} : memref<1x16x16x128xf32, #tpu.memory_space<vmem>>, vector<1x1x16x128xf32>,
    %87 = vector.extract_strided_slice %50 {offsets = [1, 0, 0], sizes = [1, 16, 128], strides = [1, 1, 1]} : vector<8x16x128xf32> to vector<1x16x128xf32>
    %88 = vector.shape_cast %87 : vector<1x16x128xf32> to vector<16x128xf32>
    %cst_83 = arith.constant 6.000000e-01 : f32
    %89 = vector.broadcast %cst_83 : f32 to vector<16x128xf32>
    %90 = arith.mulf %89, %88 : vector<16x128xf32>
    %91 = vector.extract_strided_slice %50 {offsets = [2, 0, 0], sizes = [1, 16, 128], strides = [1, 1, 1]} : vector<8x16x128xf32> to vector<1x16x128xf32>
    %92 = vector.shape_cast %91 : vector<1x16x128xf32> to vector<16x128xf32>
    %cst_84 = arith.constant 4.000000e-01 : f32
    %93 = vector.broadcast %cst_84 : f32 to vector<16x128xf32>
    %94 = arith.mulf %93, %92 : vector<16x128xf32>
    %95 = arith.addf %90, %94 : vector<16x128xf32>
    %c0_85 = arith.constant 0 : index
    %c3 = arith.constant 3 : index
    %c0_86 = arith.constant 0 : index
    %c0_87 = arith.constant 0 : index
    %96 = vector.load %arg5[%c0_85, %c3, %c0_86, %c0_87] : memref<1x16x16x128xf32, #tpu.memory_space<vmem>>, vector<1x1x16x128xf32>
    %97 = vector.shape_cast %96 : vector<1x1x16x128xf32> to vector<16x128xf32>
    %98 = vector.shape_cast %95 : vector<16x128xf32> to vector<1x1x16x128xf32>
    tpu.vector_store %arg5[%c0_85, %c3, %c0_86, %c0_87], %98 {strides = array<i32>} : memref<1x16x16x128xf32, #tpu.memory_space<vmem>>, vector<1x1x16x128xf32>,
    %99 = vector.extract_strided_slice %50 {offsets = [1, 0, 0], sizes = [1, 16, 128], strides = [1, 1, 1]} : vector<8x16x128xf32> to vector<1x16x128xf32>
    %100 = vector.shape_cast %99 : vector<1x16x128xf32> to vector<16x128xf32>
    %cst_88 = arith.constant 0.13333334 : f32
    %101 = vector.broadcast %cst_88 : f32 to vector<16x128xf32>
    %102 = arith.mulf %101, %100 : vector<16x128xf32>
    %103 = vector.extract_strided_slice %50 {offsets = [2, 0, 0], sizes = [1, 16, 128], strides = [1, 1, 1]} : vector<8x16x128xf32> to vector<1x16x128xf32>
    %104 = vector.shape_cast %103 : vector<1x16x128xf32> to vector<16x128xf32>
    %cst_89 = arith.constant 0.866666674 : f32
    %105 = vector.broadcast %cst_89 : f32 to vector<16x128xf32>
    %106 = arith.mulf %105, %104 : vector<16x128xf32>
    %107 = arith.addf %102, %106 : vector<16x128xf32>
    %c0_90 = arith.constant 0 : index
    %c4 = arith.constant 4 : index
    %c0_91 = arith.constant 0 : index
    %c0_92 = arith.constant 0 : index
    %108 = vector.load %arg5[%c0_90, %c4, %c0_91, %c0_92] : memref<1x16x16x128xf32, #tpu.memory_space<vmem>>, vector<1x1x16x128xf32>
    %109 = vector.shape_cast %108 : vector<1x1x16x128xf32> to vector<16x128xf32>
    %110 = vector.shape_cast %107 : vector<16x128xf32> to vector<1x1x16x128xf32>
    tpu.vector_store %arg5[%c0_90, %c4, %c0_91, %c0_92], %110 {strides = array<i32>} : memref<1x16x16x128xf32, #tpu.memory_space<vmem>>, vector<1x1x16x128xf32>,
    %111 = vector.extract_strided_slice %50 {offsets = [2, 0, 0], sizes = [1, 16, 128], strides = [1, 1, 1]} : vector<8x16x128xf32> to vector<1x16x128xf32>
    %112 = vector.shape_cast %111 : vector<1x16x128xf32> to vector<16x128xf32>
    %cst_93 = arith.constant 0.666666686 : f32
    %113 = vector.broadcast %cst_93 : f32 to vector<16x128xf32>
    %114 = arith.mulf %113, %112 : vector<16x128xf32>
    %115 = vector.extract_strided_slice %50 {offsets = [3, 0, 0], sizes = [1, 16, 128], strides = [1, 1, 1]} : vector<8x16x128xf32> to vector<1x16x128xf32>
    %116 = vector.shape_cast %115 : vector<1x16x128xf32> to vector<16x128xf32>
    %cst_94 = arith.constant 0.333333343 : f32
    %117 = vector.broadcast %cst_94 : f32 to vector<16x128xf32>
    %118 = arith.mulf %117, %116 : vector<16x128xf32>
    %119 = arith.addf %114, %118 : vector<16x128xf32>
    %c0_95 = arith.constant 0 : index
    %c5 = arith.constant 5 : index
    %c0_96 = arith.constant 0 : index
    %c0_97 = arith.constant 0 : index
    %120 = vector.load %arg5[%c0_95, %c5, %c0_96, %c0_97] : memref<1x16x16x128xf32, #tpu.memory_space<vmem>>, vector<1x1x16x128xf32>
    %121 = vector.shape_cast %120 : vector<1x1x16x128xf32> to vector<16x128xf32>
    %122 = vector.shape_cast %119 : vector<16x128xf32> to vector<1x1x16x128xf32>
    tpu.vector_store %arg5[%c0_95, %c5, %c0_96, %c0_97], %122 {strides = array<i32>} : memref<1x16x16x128xf32, #tpu.memory_space<vmem>>, vector<1x1x16x128xf32>,
    %123 = vector.extract_strided_slice %50 {offsets = [2, 0, 0], sizes = [1, 16, 128], strides = [1, 1, 1]} : vector<8x16x128xf32> to vector<1x16x128xf32>
    %124 = vector.shape_cast %123 : vector<1x16x128xf32> to vector<16x128xf32>
    %cst_98 = arith.constant 2.000000e-01 : f32
    %125 = vector.broadcast %cst_98 : f32 to vector<16x128xf32>
    %126 = arith.mulf %125, %124 : vector<16x128xf32>
    %127 = vector.extract_strided_slice %50 {offsets = [3, 0, 0], sizes = [1, 16, 128], strides = [1, 1, 1]} : vector<8x16x128xf32> to vector<1x16x128xf32>
    %128 = vector.shape_cast %127 : vector<1x16x128xf32> to vector<16x128xf32>
    %cst_99 = arith.constant 8.000000e-01 : f32
    %129 = vector.broadcast %cst_99 : f32 to vector<16x128xf32>
    %130 = arith.mulf %129, %128 : vector<16x128xf32>
    %131 = arith.addf %126, %130 : vector<16x128xf32>
    %c0_100 = arith.constant 0 : index
    %c6_101 = arith.constant 6 : index
    %c0_102 = arith.constant 0 : index
    %c0_103 = arith.constant 0 : index
    %132 = vector.load %arg5[%c0_100, %c6_101, %c0_102, %c0_103] : memref<1x16x16x128xf32, #tpu.memory_space<vmem>>, vector<1x1x16x128xf32>
    %133 = vector.shape_cast %132 : vector<1x1x16x128xf32> to vector<16x128xf32>
    %134 = vector.shape_cast %131 : vector<16x128xf32> to vector<1x1x16x128xf32>
    tpu.vector_store %arg5[%c0_100, %c6_101, %c0_102, %c0_103], %134 {strides = array<i32>} : memref<1x16x16x128xf32, #tpu.memory_space<vmem>>, vector<1x1x16x128xf32>,
    %135 = vector.extract_strided_slice %50 {offsets = [3, 0, 0], sizes = [1, 16, 128], strides = [1, 1, 1]} : vector<8x16x128xf32> to vector<1x16x128xf32>
    %136 = vector.shape_cast %135 : vector<1x16x128xf32> to vector<16x128xf32>
    %cst_104 = arith.constant 0.733333349 : f32
    %137 = vector.broadcast %cst_104 : f32 to vector<16x128xf32>
    %138 = arith.mulf %137, %136 : vector<16x128xf32>
    %139 = vector.extract_strided_slice %50 {offsets = [4, 0, 0], sizes = [1, 16, 128], strides = [1, 1, 1]} : vector<8x16x128xf32> to vector<1x16x128xf32>
    %140 = vector.shape_cast %139 : vector<1x16x128xf32> to vector<16x128xf32>
    %cst_105 = arith.constant 0.266666681 : f32
    %141 = vector.broadcast %cst_105 : f32 to vector<16x128xf32>
    %142 = arith.mulf %141, %140 : vector<16x128xf32>
    %143 = arith.addf %138, %142 : vector<16x128xf32>
    %c0_106 = arith.constant 0 : index
    %c7 = arith.constant 7 : index
    %c0_107 = arith.constant 0 : index
    %c0_108 = arith.constant 0 : index
    %144 = vector.load %arg5[%c0_106, %c7, %c0_107, %c0_108] : memref<1x16x16x128xf32, #tpu.memory_space<vmem>>, vector<1x1x16x128xf32>
    %145 = vector.shape_cast %144 : vector<1x1x16x128xf32> to vector<16x128xf32>
    %146 = vector.shape_cast %143 : vector<16x128xf32> to vector<1x1x16x128xf32>
    tpu.vector_store %arg5[%c0_106, %c7, %c0_107, %c0_108], %146 {strides = array<i32>} : memref<1x16x16x128xf32, #tpu.memory_space<vmem>>, vector<1x1x16x128xf32>,
    %147 = vector.extract_strided_slice %50 {offsets = [3, 0, 0], sizes = [1, 16, 128], strides = [1, 1, 1]} : vector<8x16x128xf32> to vector<1x16x128xf32>
    %148 = vector.shape_cast %147 : vector<1x16x128xf32> to vector<16x128xf32>
    %cst_109 = arith.constant 0.266666681 : f32
    %149 = vector.broadcast %cst_109 : f32 to vector<16x128xf32>
    %150 = arith.mulf %149, %148 : vector<16x128xf32>
    %151 = vector.extract_strided_slice %50 {offsets = [4, 0, 0], sizes = [1, 16, 128], strides = [1, 1, 1]} : vector<8x16x128xf32> to vector<1x16x128xf32>
    %152 = vector.shape_cast %151 : vector<1x16x128xf32> to vector<16x128xf32>
    %cst_110 = arith.constant 0.733333349 : f32
    %153 = vector.broadcast %cst_110 : f32 to vector<16x128xf32>
    %154 = arith.mulf %153, %152 : vector<16x128xf32>
    %155 = arith.addf %150, %154 : vector<16x128xf32>
    %c0_111 = arith.constant 0 : index
    %c8 = arith.constant 8 : index
    %c0_112 = arith.constant 0 : index
    %c0_113 = arith.constant 0 : index
    %156 = vector.load %arg5[%c0_111, %c8, %c0_112, %c0_113] : memref<1x16x16x128xf32, #tpu.memory_space<vmem>>, vector<1x1x16x128xf32>
    %157 = vector.shape_cast %156 : vector<1x1x16x128xf32> to vector<16x128xf32>
    %158 = vector.shape_cast %155 : vector<16x128xf32> to vector<1x1x16x128xf32>
    tpu.vector_store %arg5[%c0_111, %c8, %c0_112, %c0_113], %158 {strides = array<i32>} : memref<1x16x16x128xf32, #tpu.memory_space<vmem>>, vector<1x1x16x128xf32>,
    %159 = vector.extract_strided_slice %50 {offsets = [4, 0, 0], sizes = [1, 16, 128], strides = [1, 1, 1]} : vector<8x16x128xf32> to vector<1x16x128xf32>
    %160 = vector.shape_cast %159 : vector<1x16x128xf32> to vector<16x128xf32>
    %cst_114 = arith.constant 8.000000e-01 : f32
    %161 = vector.broadcast %cst_114 : f32 to vector<16x128xf32>
    %162 = arith.mulf %161, %160 : vector<16x128xf32>
    %163 = vector.extract_strided_slice %50 {offsets = [5, 0, 0], sizes = [1, 16, 128], strides = [1, 1, 1]} : vector<8x16x128xf32> to vector<1x16x128xf32>
    %164 = vector.shape_cast %163 : vector<1x16x128xf32> to vector<16x128xf32>
    %cst_115 = arith.constant 2.000000e-01 : f32
    %165 = vector.broadcast %cst_115 : f32 to vector<16x128xf32>
    %166 = arith.mulf %165, %164 : vector<16x128xf32>
    %167 = arith.addf %162, %166 : vector<16x128xf32>
    %c0_116 = arith.constant 0 : index
    %c9 = arith.constant 9 : index
    %c0_117 = arith.constant 0 : index
    %c0_118 = arith.constant 0 : index
    %168 = vector.load %arg5[%c0_116, %c9, %c0_117, %c0_118] : memref<1x16x16x128xf32, #tpu.memory_space<vmem>>, vector<1x1x16x128xf32>
    %169 = vector.shape_cast %168 : vector<1x1x16x128xf32> to vector<16x128xf32>
    %170 = vector.shape_cast %167 : vector<16x128xf32> to vector<1x1x16x128xf32>
    tpu.vector_store %arg5[%c0_116, %c9, %c0_117, %c0_118], %170 {strides = array<i32>} : memref<1x16x16x128xf32, #tpu.memory_space<vmem>>, vector<1x1x16x128xf32>,
    %171 = vector.extract_strided_slice %50 {offsets = [4, 0, 0], sizes = [1, 16, 128], strides = [1, 1, 1]} : vector<8x16x128xf32> to vector<1x16x128xf32>
    %172 = vector.shape_cast %171 : vector<1x16x128xf32> to vector<16x128xf32>
    %cst_119 = arith.constant 0.333333343 : f32
    %173 = vector.broadcast %cst_119 : f32 to vector<16x128xf32>
    %174 = arith.mulf %173, %172 : vector<16x128xf32>
    %175 = vector.extract_strided_slice %50 {offsets = [5, 0, 0], sizes = [1, 16, 128], strides = [1, 1, 1]} : vector<8x16x128xf32> to vector<1x16x128xf32>
    %176 = vector.shape_cast %175 : vector<1x16x128xf32> to vector<16x128xf32>
    %cst_120 = arith.constant 0.666666686 : f32
    %177 = vector.broadcast %cst_120 : f32 to vector<16x128xf32>
    %178 = arith.mulf %177, %176 : vector<16x128xf32>
    %179 = arith.addf %174, %178 : vector<16x128xf32>
    %c0_121 = arith.constant 0 : index
    %c10 = arith.constant 10 : index
    %c0_122 = arith.constant 0 : index
    %c0_123 = arith.constant 0 : index
    %180 = vector.load %arg5[%c0_121, %c10, %c0_122, %c0_123] : memref<1x16x16x128xf32, #tpu.memory_space<vmem>>, vector<1x1x16x128xf32>
    %181 = vector.shape_cast %180 : vector<1x1x16x128xf32> to vector<16x128xf32>
    %182 = vector.shape_cast %179 : vector<16x128xf32> to vector<1x1x16x128xf32>
    tpu.vector_store %arg5[%c0_121, %c10, %c0_122, %c0_123], %182 {strides = array<i32>} : memref<1x16x16x128xf32, #tpu.memory_space<vmem>>, vector<1x1x16x128xf32>,
    %183 = vector.extract_strided_slice %50 {offsets = [5, 0, 0], sizes = [1, 16, 128], strides = [1, 1, 1]} : vector<8x16x128xf32> to vector<1x16x128xf32>
    %184 = vector.shape_cast %183 : vector<1x16x128xf32> to vector<16x128xf32>
    %cst_124 = arith.constant 0.866666674 : f32
    %185 = vector.broadcast %cst_124 : f32 to vector<16x128xf32>
    %186 = arith.mulf %185, %184 : vector<16x128xf32>
    %187 = vector.extract_strided_slice %50 {offsets = [6, 0, 0], sizes = [1, 16, 128], strides = [1, 1, 1]} : vector<8x16x128xf32> to vector<1x16x128xf32>
    %188 = vector.shape_cast %187 : vector<1x16x128xf32> to vector<16x128xf32>
    %cst_125 = arith.constant 0.13333334 : f32
    %189 = vector.broadcast %cst_125 : f32 to vector<16x128xf32>
    %190 = arith.mulf %189, %188 : vector<16x128xf32>
    %191 = arith.addf %186, %190 : vector<16x128xf32>
    %c0_126 = arith.constant 0 : index
    %c11 = arith.constant 11 : index
    %c0_127 = arith.constant 0 : index
    %c0_128 = arith.constant 0 : index
    %192 = vector.load %arg5[%c0_126, %c11, %c0_127, %c0_128] : memref<1x16x16x128xf32, #tpu.memory_space<vmem>>, vector<1x1x16x128xf32>
    %193 = vector.shape_cast %192 : vector<1x1x16x128xf32> to vector<16x128xf32>
    %194 = vector.shape_cast %191 : vector<16x128xf32> to vector<1x1x16x128xf32>
    tpu.vector_store %arg5[%c0_126, %c11, %c0_127, %c0_128], %194 {strides = array<i32>} : memref<1x16x16x128xf32, #tpu.memory_space<vmem>>, vector<1x1x16x128xf32>,
    %195 = vector.extract_strided_slice %50 {offsets = [5, 0, 0], sizes = [1, 16, 128], strides = [1, 1, 1]} : vector<8x16x128xf32> to vector<1x16x128xf32>
    %196 = vector.shape_cast %195 : vector<1x16x128xf32> to vector<16x128xf32>
    %cst_129 = arith.constant 4.000000e-01 : f32
    %197 = vector.broadcast %cst_129 : f32 to vector<16x128xf32>
    %198 = arith.mulf %197, %196 : vector<16x128xf32>
    %199 = vector.extract_strided_slice %50 {offsets = [6, 0, 0], sizes = [1, 16, 128], strides = [1, 1, 1]} : vector<8x16x128xf32> to vector<1x16x128xf32>
    %200 = vector.shape_cast %199 : vector<1x16x128xf32> to vector<16x128xf32>
    %cst_130 = arith.constant 6.000000e-01 : f32
    %201 = vector.broadcast %cst_130 : f32 to vector<16x128xf32>
    %202 = arith.mulf %201, %200 : vector<16x128xf32>
    %203 = arith.addf %198, %202 : vector<16x128xf32>
    %c0_131 = arith.constant 0 : index
    %c12 = arith.constant 12 : index
    %c0_132 = arith.constant 0 : index
    %c0_133 = arith.constant 0 : index
    %204 = vector.load %arg5[%c0_131, %c12, %c0_132, %c0_133] : memref<1x16x16x128xf32, #tpu.memory_space<vmem>>, vector<1x1x16x128xf32>
    %205 = vector.shape_cast %204 : vector<1x1x16x128xf32> to vector<16x128xf32>
    %206 = vector.shape_cast %203 : vector<16x128xf32> to vector<1x1x16x128xf32>
    tpu.vector_store %arg5[%c0_131, %c12, %c0_132, %c0_133], %206 {strides = array<i32>} : memref<1x16x16x128xf32, #tpu.memory_space<vmem>>, vector<1x1x16x128xf32>,
    %207 = vector.extract_strided_slice %50 {offsets = [6, 0, 0], sizes = [1, 16, 128], strides = [1, 1, 1]} : vector<8x16x128xf32> to vector<1x16x128xf32>
    %208 = vector.shape_cast %207 : vector<1x16x128xf32> to vector<16x128xf32>
    %cst_134 = arith.constant 0.933333337 : f32
    %209 = vector.broadcast %cst_134 : f32 to vector<16x128xf32>
    %210 = arith.mulf %209, %208 : vector<16x128xf32>
    %211 = vector.extract_strided_slice %50 {offsets = [7, 0, 0], sizes = [1, 16, 128], strides = [1, 1, 1]} : vector<8x16x128xf32> to vector<1x16x128xf32>
    %212 = vector.shape_cast %211 : vector<1x16x128xf32> to vector<16x128xf32>
    %cst_135 = arith.constant 0.0666666701 : f32
    %213 = vector.broadcast %cst_135 : f32 to vector<16x128xf32>
    %214 = arith.mulf %213, %212 : vector<16x128xf32>
    %215 = arith.addf %210, %214 : vector<16x128xf32>
    %c0_136 = arith.constant 0 : index
    %c13 = arith.constant 13 : index
    %c0_137 = arith.constant 0 : index
    %c0_138 = arith.constant 0 : index
    %216 = vector.load %arg5[%c0_136, %c13, %c0_137, %c0_138] : memref<1x16x16x128xf32, #tpu.memory_space<vmem>>, vector<1x1x16x128xf32>
    %217 = vector.shape_cast %216 : vector<1x1x16x128xf32> to vector<16x128xf32>
    %218 = vector.shape_cast %215 : vector<16x128xf32> to vector<1x1x16x128xf32>
    tpu.vector_store %arg5[%c0_136, %c13, %c0_137, %c0_138], %218 {strides = array<i32>} : memref<1x16x16x128xf32, #tpu.memory_space<vmem>>, vector<1x1x16x128xf32>,
    %219 = vector.extract_strided_slice %50 {offsets = [6, 0, 0], sizes = [1, 16, 128], strides = [1, 1, 1]} : vector<8x16x128xf32> to vector<1x16x128xf32>
    %220 = vector.shape_cast %219 : vector<1x16x128xf32> to vector<16x128xf32>
    %cst_139 = arith.constant 0.466666669 : f32
    %221 = vector.broadcast %cst_139 : f32 to vector<16x128xf32>
    %222 = arith.mulf %221, %220 : vector<16x128xf32>
    %223 = vector.extract_strided_slice %50 {offsets = [7, 0, 0], sizes = [1, 16, 128], strides = [1, 1, 1]} : vector<8x16x128xf32> to vector<1x16x128xf32>
    %224 = vector.shape_cast %223 : vector<1x16x128xf32> to vector<16x128xf32>
    %cst_140 = arith.constant 0.533333361 : f32
    %225 = vector.broadcast %cst_140 : f32 to vector<16x128xf32>
    %226 = arith.mulf %225, %224 : vector<16x128xf32>
    %227 = arith.addf %222, %226 : vector<16x128xf32>
    %c0_141 = arith.constant 0 : index
    %c14 = arith.constant 14 : index
    %c0_142 = arith.constant 0 : index
    %c0_143 = arith.constant 0 : index
    %228 = vector.load %arg5[%c0_141, %c14, %c0_142, %c0_143] : memref<1x16x16x128xf32, #tpu.memory_space<vmem>>, vector<1x1x16x128xf32>
    %229 = vector.shape_cast %228 : vector<1x1x16x128xf32> to vector<16x128xf32>
    %230 = vector.shape_cast %227 : vector<16x128xf32> to vector<1x1x16x128xf32>
    tpu.vector_store %arg5[%c0_141, %c14, %c0_142, %c0_143], %230 {strides = array<i32>} : memref<1x16x16x128xf32, #tpu.memory_space<vmem>>, vector<1x1x16x128xf32>,
    %231 = vector.extract_strided_slice %50 {offsets = [7, 0, 0], sizes = [1, 16, 128], strides = [1, 1, 1]} : vector<8x16x128xf32> to vector<1x16x128xf32>
    %232 = vector.shape_cast %231 : vector<1x16x128xf32> to vector<16x128xf32>
    %cst_144 = arith.constant 1.000000e+00 : f32
    %233 = vector.broadcast %cst_144 : f32 to vector<16x128xf32>
    %234 = arith.mulf %233, %232 : vector<16x128xf32>
    %235 = vector.extract_strided_slice %50 {offsets = [7, 0, 0], sizes = [1, 16, 128], strides = [1, 1, 1]} : vector<8x16x128xf32> to vector<1x16x128xf32>
    %236 = vector.shape_cast %235 : vector<1x16x128xf32> to vector<16x128xf32>
    %cst_145 = arith.constant 0.000000e+00 : f32
    %237 = vector.broadcast %cst_145 : f32 to vector<16x128xf32>
    %238 = arith.mulf %237, %236 : vector<16x128xf32>
    %239 = arith.addf %234, %238 : vector<16x128xf32>
    %c0_146 = arith.constant 0 : index
    %c15 = arith.constant 15 : index
    %c0_147 = arith.constant 0 : index
    %c0_148 = arith.constant 0 : index
    %240 = vector.load %arg5[%c0_146, %c15, %c0_147, %c0_148] : memref<1x16x16x128xf32, #tpu.memory_space<vmem>>, vector<1x1x16x128xf32>
    %241 = vector.shape_cast %240 : vector<1x1x16x128xf32> to vector<16x128xf32>
    %242 = vector.shape_cast %239 : vector<16x128xf32> to vector<1x1x16x128xf32>
    tpu.vector_store %arg5[%c0_146, %c15, %c0_147, %c0_148], %242 {strides = array<i32>} : memref<1x16x16x128xf32, #tpu.memory_space<vmem>>, vector<1x1x16x128xf32>,
    return
  }
  func.func @transform_0(%arg0: i32) -> (i32, i32, i32, i32) {
    %c0_i32 = arith.constant 0 : i32
    %c0_i32_0 = arith.constant 0 : i32
    %c0_i32_1 = arith.constant 0 : i32
    %c0_i32_2 = arith.constant 0 : i32
    return %arg0, %c0_i32, %c0_i32_0, %c0_i32_1 : i32, i32, i32, i32
  }
  func.func @transform_1(%arg0: i32) -> (i32, i32) {
    %c0_i32 = arith.constant 0 : i32
    %c0_i32_0 = arith.constant 0 : i32
    %c0_i32_1 = arith.constant 0 : i32
    return %c0_i32, %c0_i32_0 : i32, i32
  }
  func.func @transform_2(%arg0: i32) -> (i32, i32) {
    %c0_i32 = arith.constant 0 : i32
    %c0_i32_0 = arith.constant 0 : i32
    %c0_i32_1 = arith.constant 0 : i32
    return %c0_i32, %c0_i32_0 : i32, i32
  }
  func.func @transform_3(%arg0: i32) -> (i32, i32) {
    %c0_i32 = arith.constant 0 : i32
    %c0_i32_0 = arith.constant 0 : i32
    %c0_i32_1 = arith.constant 0 : i32
    return %c0_i32, %c0_i32_0 : i32, i32
  }
  func.func @transform_4(%arg0: i32) -> (i32, i32, i32, i32) {
    %c0_i32 = arith.constant 0 : i32
    %c0_i32_0 = arith.constant 0 : i32
    %c0_i32_1 = arith.constant 0 : i32
    %c0_i32_2 = arith.constant 0 : i32
    return %arg0, %c0_i32, %c0_i32_0, %c0_i32_1 : i32, i32, i32, i32
  }
}

</mosaic_0001>

<llo_original>
// kernel: tpu_custom_call.1
$region0: #{tpu_custom_call.1}
  #allocation0 [shape = 'u32[]', space=smem, size = 0x4, offset = 0x4, fixed_abs, tag = 'smem constant byte address 0x4 - core index']
  #allocation1 [shape = 'u32[144,128]{1,0:T(1,128)}', space=vmem, size = 0x12000, scoped, tag = 'internal scratch']
  #allocation2 [shape = 'f32[8,8,288]{2,1,0:T(8,128)}', space=vmem, size = 0x18000, scoped, tag = 'scratch operand']
  %s0 = inlined_call_operand.hbm [shape: bf16[2,8,8,32], index: 0, kind: input, shape index: {}]
  %s1 = inlined_call_operand.hbm [shape: bf16[288,128], index: 1, kind: input, shape index: {}]
  %s2 = inlined_call_operand.vmem [shape: f32[1,128], index: 2, kind: input, shape index: {}]
  %s3 = inlined_call_operand.vmem [shape: f32[16,8], index: 3, kind: input, shape index: {}]
  %s4 = inlined_call_operand.hbm [shape: f32[2,16,16,128], index: 4, kind: output, shape index: {}]
  %s5 = sld [smem:[#allocation0]]
  $region57: #{tpu_custom_call.1} parent=0
    _
  %s7 = ssub.s32 1, %s5
  %s8 = scalar_select 0, %s7, %s5
  $region1: #{tpu_custom_call.1} parent=0
    #allocation3 [shape = 'u8[32768]{0}', space=vmem, size = 0x8000, scoped, tag = 'input window, operand 0']
    #allocation4 [shape = 's32[2]{0}', space=sflag, size = 0x8, scoped, tag = 'scoped memory for tpu_custom_call.1']
    #allocation5 [shape = 's32[2]{0}', space=sflag, size = 0x8, scoped, tag = 'scoped memory for tpu_custom_call.1']
    #allocation6 [shape = 'u8[73728]{0}', space=vmem, size = 0x12000, scoped, tag = 'input window, operand 1, single buffered']
    #allocation7 [shape = 's32[1]{0}', space=sflag, size = 0x4, scoped, tag = 'scoped memory for tpu_custom_call.1']
    #allocation8 [shape = 'u8[262144]{0}', space=vmem, size = 0x40000, scoped, tag = 'output window, operand 0']
    %9 = vsyncpa [#allocation4], 0
    %s10 = scalar_lea.sflag [#allocation4], 1
    %11 = vsyncpa %s10, 0
    %12 = vsyncpa [#allocation7], 0
    %13 = vsyncpa [#allocation5], 0
    %s14 = scalar_lea.sflag [#allocation5], 1
    %15 = vsyncpa %s14, 0
    loop: start=0, step=1, limit=4
    $region2: #{tpu_custom_call.1} parent=1 // loop_pre_header
      _
    $region3: #{tpu_custom_call.1} parent=1 // loop_header
      %s17 = sphi 0, %s21
      %p18 = scmp.ge.s32.totalorder %s17, 4
      %s27 = sphi 0, %s29
      %s30 = sphi 0, %s27
      %s31 = sphi 0, %s30
      %s47 = sphi 0, %s31
      %s51 = sphi 0, %s51
      %s53 = sphi 0, %s51
      %s54 = sphi 0, %s53
      %s68 = sphi 0, %s54
      %s72 = sphi 0, %s72
      %s74 = sphi 0, %s72
      %s75 = sphi 0, %s74
      %s89 = sphi 0, %s75
      %s93 = sphi 0, %s93
      %s95 = sphi 0, %s93
      %s96 = sphi 0, %s95
      %s110 = sphi 0, %s96
      %s116 = sphi 0, %s118
      %s119 = sphi 0, %s116
      %s120 = sphi 0, %s119
      %s136 = sphi 0, %s120
    $region4: #{tpu_custom_call.1} parent=1 // loop_header_branch
      %20 = sbr.rel (%p18) target = $region8
    $region5: #{tpu_custom_call.1} parent=1 // loop_body
      %s22 = ssub.s32 %s17, 1
      %s23 = ssub.s32 %s17, 2
      %s24 = sadd.s32 %s17, 1
      %s25 = ssub.s32 %s17, %s24
      %p26 = scmp.eq.s32.totalorder %s25, 0
      %s28 = sadd.s32 %s27, 1
      %s29 = scalar_select %p26, %s27, %s28
      %p32 = pneg %p26
      %p33 = scmp.eq.s32.totalorder %s17, 1
      %p34 = por %p32, %p33
      %p35 = scmp.ne.s32.totalorder %s27, %s30
      %p36 = scmp.eq.s32.totalorder %s17, 0
      %p37 = por %p35, %p36
      %p38 = scmp.ne.s32.totalorder %s27, %s30
      %p39 = scmp.eq.s32.totalorder %s22, 1
      %p40 = por %p38, %p39
      %p41 = scmp.ne.s32.totalorder %s30, %s31
      %p42 = scmp.eq.s32.totalorder %s22, 0
      %p43 = por %p41, %p42
      %p44 = scmp.ne.s32.totalorder %s30, %s31
      %p45 = scmp.eq.s32.totalorder %s23, 1
      %p46 = por %p44, %p45
      %p48 = scmp.ne.s32.totalorder %s31, %s47
      %p49 = scmp.eq.s32.totalorder %s23, 0
      %p50 = por %p48, %p49
      %s52 = sadd.s32 %s51, 1
      %p55 = scmp.eq.s32.totalorder %s17, 1
      %p56 = scmp.ne.s32.totalorder %s51, %s53
      %p57 = scmp.eq.s32.totalorder %s17, 0
      %p58 = por %p56, %p57
      %p59 = scmp.ne.s32.totalorder %s51, %s53
      %p60 = scmp.eq.s32.totalorder %s22, 1
      %p61 = por %p59, %p60
      %p62 = scmp.ne.s32.totalorder %s53, %s54
      %p63 = scmp.eq.s32.totalorder %s22, 0
      %p64 = por %p62, %p63
      %p65 = scmp.ne.s32.totalorder %s53, %s54
      %p66 = scmp.eq.s32.totalorder %s23, 1
      %p67 = por %p65, %p66
      %p69 = scmp.ne.s32.totalorder %s54, %s68
      %p70 = scmp.eq.s32.totalorder %s23, 0
      %p71 = por %p69, %p70
      %s73 = sadd.s32 %s72, 1
      %p76 = scmp.eq.s32.totalorder %s17, 1
      %p77 = scmp.ne.s32.totalorder %s72, %s74
      %p78 = scmp.eq.s32.totalorder %s17, 0
      %p79 = por %p77, %p78
      %p80 = scmp.ne.s32.totalorder %s72, %s74
      %p81 = scmp.eq.s32.totalorder %s22, 1
      %p82 = por %p80, %p81
      %p83 = scmp.ne.s32.totalorder %s74, %s75
      %p84 = scmp.eq.s32.totalorder %s22, 0
      %p85 = por %p83, %p84
      %p86 = scmp.ne.s32.totalorder %s74, %s75
      %p87 = scmp.eq.s32.totalorder %s23, 1
      %p88 = por %p86, %p87
      %p90 = scmp.ne.s32.totalorder %s75, %s89
      %p91 = scmp.eq.s32.totalorder %s23, 0
      %p92 = por %p90, %p91
      %s94 = sadd.s32 %s93, 1
      %p97 = scmp.eq.s32.totalorder %s17, 1
      %p98 = scmp.ne.s32.totalorder %s93, %s95
      %p99 = scmp.eq.s32.totalorder %s17, 0
      %p100 = por %p98, %p99
      %p101 = scmp.ne.s32.totalorder %s93, %s95
      %p102 = scmp.eq.s32.totalorder %s22, 1
      %p103 = por %p101, %p102
      %p104 = scmp.ne.s32.totalorder %s95, %s96
      %p105 = scmp.eq.s32.totalorder %s22, 0
      %p106 = por %p104, %p105
      %p107 = scmp.ne.s32.totalorder %s95, %s96
      %p108 = scmp.eq.s32.totalorder %s23, 1
      %p109 = por %p107, %p108
      %p111 = scmp.ne.s32.totalorder %s96, %s110
      %p112 = scmp.eq.s32.totalorder %s23, 0
      %p113 = por %p111, %p112
      %s114 = ssub.s32 %s17, %s24
      %p115 = scmp.eq.s32.totalorder %s114, 0
      %s117 = sadd.s32 %s116, 1
      %s118 = scalar_select %p115, %s116, %s117
      %p121 = pneg %p115
      %p122 = scmp.eq.s32.totalorder %s17, 1
      %p123 = por %p121, %p122
      %p124 = scmp.ne.s32.totalorder %s116, %s119
      %p125 = scmp.eq.s32.totalorder %s17, 0
      %p126 = por %p124, %p125
      %p127 = scmp.ne.s32.totalorder %s116, %s119
      %p128 = scmp.eq.s32.totalorder %s22, 1
      %p129 = por %p127, %p128
      %p130 = scmp.ne.s32.totalorder %s119, %s120
      %p131 = scmp.eq.s32.totalorder %s22, 0
      %p132 = por %p130, %p131
      %p133 = scmp.ne.s32.totalorder %s119, %s120
      %p134 = scmp.eq.s32.totalorder %s23, 1
      %p135 = por %p133, %p134
      %p137 = scmp.ne.s32.totalorder %s120, %s136
      %p138 = scmp.eq.s32.totalorder %s23, 0
      %p139 = por %p137, %p138
      %p140 = scmp.le.s32.totalorder 1, %s17
      %p141 = scmp.lt.s32.totalorder %s17, 3
      %p142 = pnand %p140, %p141
      %p143 = pneg %p142
      // Predicated region
      $region9: #{tpu_custom_call.1} parent=5 // pred_check
        _
      $region10: #{tpu_custom_call.1} parent=5 // pred_check_branch
        %145 = sbr.rel (%p142) target = $region12
      $region11: #{tpu_custom_call.1} parent=5 // pred_region
        %s146 = ssub.s32 %s17, 1
        // Predicated region
        $region13: #{tpu_custom_call.1} parent=11 // pred_check
          %p147 = pneg %p64
        $region14: #{tpu_custom_call.1} parent=11 // pred_check_branch
          %149 = sbr.rel (%p147) target = $region16
        $region15: #{tpu_custom_call.1} parent=11 // pred_region
          %s151 = ssub.s32 2304, 2304
          %152 = vsyncadd [#allocation7], %s151
          %s153 = sshll.u32 [#allocation6], 4
          %s154 = int_to_ptr.vmem [resolvable:$true] %s153
          %159 = dma.hbm_to_vmem [thread:$0]  %s1, 2304, %s154, [#allocation7], 64, 64, 4
        $region16: #{tpu_custom_call.1} parent=11 // pred_fallthru
          _
        // Predicated region
        $region17: #{tpu_custom_call.1} parent=11 // pred_check
          %p160 = pneg %p85
        $region18: #{tpu_custom_call.1} parent=11 // pred_check_branch
          %162 = sbr.rel (%p160) target = $region20
        $region19: #{tpu_custom_call.1} parent=11 // pred_region
          _
        $region20: #{tpu_custom_call.1} parent=11 // pred_fallthru
          _
        // Predicated region
        $region21: #{tpu_custom_call.1} parent=11 // pred_check
          %p163 = pneg %p106
        $region22: #{tpu_custom_call.1} parent=11 // pred_check_branch
          %165 = sbr.rel (%p163) target = $region24
        $region23: #{tpu_custom_call.1} parent=11 // pred_region
          _
        $region24: #{tpu_custom_call.1} parent=11 // pred_fallthru
          _
      $region12: #{tpu_custom_call.1} parent=5 // pred_fallthru
        _
      %p166 = scmp.lt.s32.totalorder %s17, 2
      // Predicated region
      $region25: #{tpu_custom_call.1} parent=5 // pred_check
        %p167 = pneg %p166
      $region26: #{tpu_custom_call.1} parent=5 // pred_check_branch
        %169 = sbr.rel (%p167) target = $region28
      $region27: #{tpu_custom_call.1} parent=5 // pred_region
        // Predicated region
        $region29: #{tpu_custom_call.1} parent=27 // pred_check
          %p170 = pneg %p37
        $region30: #{tpu_custom_call.1} parent=27 // pred_check_branch
          %172 = sbr.rel (%p170) target = $region32
        $region31: #{tpu_custom_call.1} parent=27 // pred_region
          %s173 = sand.u32 %s27, 1
          %s174 = scalar_lea.sflag [#allocation4], %s173
          %s175 = sand.u32 %s27, 1
          %s176 = smul.addr %s175, 32
          %s177 = scalar_lea.vmem [#allocation3], %s176
          %s179 = ssub.s32 512, 512
          %180 = vsyncadd %s174, %s179
          %s181 = smul.addr %s17, 8
          %s182 = smul.addr %s181, 64
          %s183 = scalar_lea.hbm %s0, %s182
          %s184 = sshll.u32 %s177, 4
          %s185 = int_to_ptr.vmem [resolvable:$true] %s184
          %190 = dma.hbm_to_vmem [thread:$0]  %s183, 512, %s185, %s174, 64, 64, 4
        $region32: #{tpu_custom_call.1} parent=27 // pred_fallthru
          _
      $region28: #{tpu_custom_call.1} parent=5 // pred_fallthru
        _
      %p191 = scmp.le.s32.totalorder 1, %s17
      %p192 = scmp.lt.s32.totalorder %s17, 3
      %p193 = pnand %p191, %p192
      %p194 = pneg %p193
      // Predicated region
      $region33: #{tpu_custom_call.1} parent=5 // pred_check
        _
      $region34: #{tpu_custom_call.1} parent=5 // pred_check_branch
        %196 = sbr.rel (%p193) target = $region36
      $region35: #{tpu_custom_call.1} parent=5 // pred_region
        %s197 = ssub.s32 %s17, 1
        %s198 = sand.u32 %s30, 1
        %s199 = scalar_lea.sflag [#allocation4], %s198
        %s200 = sand.u32 %s30, 1
        %s201 = smul.addr %s200, 32
        %s202 = scalar_lea.vmem [#allocation3], %s201
        // Predicated region
        $region37: #{tpu_custom_call.1} parent=35 // pred_check
          %p203 = pneg %p43
        $region38: #{tpu_custom_call.1} parent=35 // pred_check_branch
          %205 = sbr.rel (%p203) target = $region40
        $region39: #{tpu_custom_call.1} parent=35 // pred_region
          %206 = dma.done %s199, 512
        $region40: #{tpu_custom_call.1} parent=35 // pred_fallthru
          _
        // Predicated region
        $region41: #{tpu_custom_call.1} parent=35 // pred_check
          %p207 = pneg %p64
        $region42: #{tpu_custom_call.1} parent=35 // pred_check_branch
          %209 = sbr.rel (%p207) target = $region44
        $region43: #{tpu_custom_call.1} parent=35 // pred_region
          %210 = dma.done [#allocation7], 2304
        $region44: #{tpu_custom_call.1} parent=35 // pred_fallthru
          _
        %s211 = sand.u32 %s30, 1
        %s212 = scalar_lea.sflag [#allocation4], %s211
        %s213 = sand.u32 %s30, 1
        %s214 = smul.addr %s213, 32
        %s215 = scalar_lea.vmem [#allocation3], %s214
        %p216 = pneg %p43
        %p217 = pneg %p40
        %p218 = pneg %p64
        %p219 = pneg %p61
        %p220 = pneg %p85
        %p221 = pneg %p82
        %p222 = pneg %p106
        %p223 = pneg %p103
        %p224 = pneg %p132
        %p225 = pneg %p129
        %s226 = sand.u32 %s119, 1
        %s227 = scalar_lea.sflag [#allocation5], %s226
        %s228 = sand.u32 %s119, 1
        %s229 = smul.addr %s228, 256
        %s230 = scalar_lea.vmem [#allocation8], %s229
        %232 = vst [vmem:[#allocation2] sm:$0xff] 0.0
        %233 = vst [vmem:[#allocation2 + $0x8] sm:$0xff] 0.0
        %vm234 = vcmask 261120
        %235 = vst.msk [vmem:[#allocation2 + $0x10] sm:$0xff] %vm234, 0.0
        %236 = vst [vmem:[#allocation2 + $0x18] sm:$0xff] 0.0
        %237 = vst [vmem:[#allocation2 + $0x20] sm:$0xff] 0.0
        %238 = vst.msk [vmem:[#allocation2 + $0x28] sm:$0xff] %vm234, 0.0
        %239 = vst [vmem:[#allocation2 + $0x30] sm:$0xff] 0.0
        %240 = vst [vmem:[#allocation2 + $0x38] sm:$0xff] 0.0
        %241 = vst.msk [vmem:[#allocation2 + $0x40] sm:$0xff] %vm234, 0.0
        %242 = vst [vmem:[#allocation2 + $0x48] sm:$0xff] 0.0
        %243 = vst [vmem:[#allocation2 + $0x50] sm:$0xff] 0.0
        %244 = vst.msk [vmem:[#allocation2 + $0x58] sm:$0xff] %vm234, 0.0
        %245 = vst [vmem:[#allocation2 + $0x60] sm:$0xff] 0.0
        %246 = vst [vmem:[#allocation2 + $0x68] sm:$0xff] 0.0
        %247 = vst.msk [vmem:[#allocation2 + $0x70] sm:$0xff] %vm234, 0.0
        %248 = vst [vmem:[#allocation2 + $0x78] sm:$0xff] 0.0
        %249 = vst [vmem:[#allocation2 + $0x80] sm:$0xff] 0.0
        %250 = vst.msk [vmem:[#allocation2 + $0x88] sm:$0xff] %vm234, 0.0
        %251 = vst [vmem:[#allocation2 + $0x90] sm:$0xff] 0.0
        %252 = vst [vmem:[#allocation2 + $0x98] sm:$0xff] 0.0
        %253 = vst.msk [vmem:[#allocation2 + $0xa0] sm:$0xff] %vm234, 0.0
        %254 = vst [vmem:[#allocation2 + $0xa8] sm:$0xff] 0.0
        %255 = vst [vmem:[#allocation2 + $0xb0] sm:$0xff] 0.0
        %256 = vst.msk [vmem:[#allocation2 + $0xb8] sm:$0xff] %vm234, 0.0
        %v257 = vld [vmem:[%s202] sm:$0x1]
        %v258 = vld [vmem:[%s202 + $0x4] sm:$0x1]
        %v259 = vunpack.c.l.bf16 %v257
        %v260 = vunpack.c.l.bf16 %v258
        %v263 = vrot.slane %v259, 2
        %v264 = vrot.slane %v260, 2
        %s267 = scalar_lea.vmem [#allocation2], 144
        %vm268 = vcmask 261126
        %269 = vst.msk [vmem:[%s267] sm:$0xc0] %vm268, %v263
        %270 = vst.msk [vmem:[%s267 + $0x18] sm:$0xc0] %vm268, %v264
        %v271 = vld [vmem:[%s202] sm:$0xf]
        %v272 = vld [vmem:[%s202 + $0x4] sm:$0xf]
        %v273 = vunpack.c.l.bf16 %v271
        %v274 = vunpack.c.l.bf16 %v272
        %277 = vrot.lane.b32.xlu0 %v273, 32
        %v278 = vpop.permute.xlu0 %277
        %279 = vrot.lane.b32.xlu0 %v274, 32
        %v280 = vpop.permute.xlu0 %279
        %vm283 = vcmask 523520
        %284 = vst.msk [vmem:[%s267] sm:$0xff] %vm283, %v278
        %285 = vst.msk [vmem:[%s267 + $0x18] sm:$0xff] %vm283, %v280
        %v286 = vld [vmem:[%s202] sm:$0x8]
        %v287 = vld [vmem:[%s202 + $0x4] sm:$0x8]
        %v288 = vunpack.c.l.bf16 %v286
        %v289 = vunpack.c.l.bf16 %v287
        %v292 = vrot.slane %v288, 6
        %v293 = vrot.slane %v289, 6
        %294 = vrot.lane.b32.xlu0 %v292, 64
        %v295 = vpop.permute.xlu0 %294
        %296 = vrot.lane.b32.xlu0 %v293, 64
        %v297 = vpop.permute.xlu0 %296
        %vm300 = vcmask 779776
        %301 = vst.msk [vmem:[%s267] sm:$0x3] %vm300, %v295
        %302 = vst.msk [vmem:[%s267 + $0x18] sm:$0x3] %vm300, %v297
        %v303 = vld [vmem:[%s202] sm:$0x1]
        %v304 = vld [vmem:[%s202 + $0x4] sm:$0x1]
        %v305 = vld [vmem:[%s202 + $0x8] sm:$0x1]
        %v306 = vld [vmem:[%s202 + $0xc] sm:$0x1]
        %v307 = vld [vmem:[%s202 + $0x10] sm:$0x1]
        %v308 = vld [vmem:[%s202 + $0x14] sm:$0x1]
        %v309 = vld [vmem:[%s202 + $0x18] sm:$0x1]
        %v310 = vld [vmem:[%s202 + $0x1c] sm:$0x1]
        %v311 = vunpack.c.l.bf16 %v303
        %v312 = vunpack.c.l.bf16 %v304
        %v313 = vunpack.c.l.bf16 %v305
        %v314 = vunpack.c.l.bf16 %v306
        %v315 = vunpack.c.l.bf16 %v307
        %v316 = vunpack.c.l.bf16 %v308
        %v317 = vunpack.c.l.bf16 %v309
        %v318 = vunpack.c.l.bf16 %v310
        %v327 = vrot.slane %v311, 2
        %v328 = vrot.slane %v312, 2
        %v329 = vrot.slane %v313, 2
        %v330 = vrot.slane %v314, 2
        %v331 = vrot.slane %v315, 2
        %v332 = vrot.slane %v316, 2
        %v333 = vrot.slane %v317, 2
        %v334 = vrot.slane %v318, 2
        %335 = vrot.lane.b32.xlu0 %v327, 96
        %v336 = vpop.permute.xlu0 %335
        %337 = vrot.lane.b32.xlu0 %v328, 96
        %v338 = vpop.permute.xlu0 %337
        %339 = vrot.lane.b32.xlu0 %v329, 96
        %v340 = vpop.permute.xlu0 %339
        %341 = vrot.lane.b32.xlu0 %v330, 96
        %v342 = vpop.permute.xlu0 %341
        %343 = vrot.lane.b32.xlu0 %v331, 96
        %v344 = vpop.permute.xlu0 %343
        %345 = vrot.lane.b32.xlu0 %v332, 96
        %v346 = vpop.permute.xlu0 %345
        %347 = vrot.lane.b32.xlu0 %v333, 96
        %v348 = vpop.permute.xlu0 %347
        %349 = vrot.lane.b32.xlu0 %v334, 96
        %v350 = vpop.permute.xlu0 %349
        %vm359 = vcmask 1048326
        %360 = vst.msk [vmem:[#allocation2] sm:$0xc0] %vm359, %v336
        %361 = vst.msk [vmem:[#allocation2 + $0x18] sm:$0xc0] %vm359, %v338
        %362 = vst.msk [vmem:[#allocation2 + $0x30] sm:$0xc0] %vm359, %v340
        %363 = vst.msk [vmem:[#allocation2 + $0x48] sm:$0xc0] %vm359, %v342
        %364 = vst.msk [vmem:[#allocation2 + $0x60] sm:$0xc0] %vm359, %v344
        %365 = vst.msk [vmem:[#allocation2 + $0x78] sm:$0xc0] %vm359, %v346
        %366 = vst.msk [vmem:[#allocation2 + $0x90] sm:$0xc0] %vm359, %v348
        %367 = vst.msk [vmem:[#allocation2 + $0xa8] sm:$0xc0] %vm359, %v350
        %v368 = vld [vmem:[%s202] sm:$0xf]
        %v369 = vld [vmem:[%s202 + $0x4] sm:$0xf]
        %v370 = vld [vmem:[%s202 + $0x8] sm:$0xf]
        %v371 = vld [vmem:[%s202 + $0xc] sm:$0xf]
        %v372 = vld [vmem:[%s202 + $0x10] sm:$0xf]
        %v373 = vld [vmem:[%s202 + $0x14] sm:$0xf]
        %v374 = vld [vmem:[%s202 + $0x18] sm:$0xf]
        %v375 = vld [vmem:[%s202 + $0x1c] sm:$0xf]
        %v376 = vunpack.c.l.bf16 %v368
        %v377 = vunpack.c.l.bf16 %v369
        %v378 = vunpack.c.l.bf16 %v370
        %v379 = vunpack.c.l.bf16 %v371
        %v380 = vunpack.c.l.bf16 %v372
        %v381 = vunpack.c.l.bf16 %v373
        %v382 = vunpack.c.l.bf16 %v374
        %v383 = vunpack.c.l.bf16 %v375
        %384 = vst.msk [vmem:[#allocation2 + $0x8] sm:$0xff] %vm234, %v376
        %385 = vst.msk [vmem:[#allocation2 + $0x20] sm:$0xff] %vm234, %v377
        %386 = vst.msk [vmem:[#allocation2 + $0x38] sm:$0xff] %vm234, %v378
        %387 = vst.msk [vmem:[#allocation2 + $0x50] sm:$0xff] %vm234, %v379
        %388 = vst.msk [vmem:[#allocation2 + $0x68] sm:$0xff] %vm234, %v380
        %389 = vst.msk [vmem:[#allocation2 + $0x80] sm:$0xff] %vm234, %v381
        %390 = vst.msk [vmem:[#allocation2 + $0x98] sm:$0xff] %vm234, %v382
        %391 = vst.msk [vmem:[#allocation2 + $0xb0] sm:$0xff] %vm234, %v383
        %v392 = vld [vmem:[%s202] sm:$0x8]
        %v393 = vld [vmem:[%s202 + $0x4] sm:$0x8]
        %v394 = vld [vmem:[%s202 + $0x8] sm:$0x8]
        %v395 = vld [vmem:[%s202 + $0xc] sm:$0x8]
        %v396 = vld [vmem:[%s202 + $0x10] sm:$0x8]
        %v397 = vld [vmem:[%s202 + $0x14] sm:$0x8]
        %v398 = vld [vmem:[%s202 + $0x18] sm:$0x8]
        %v399 = vld [vmem:[%s202 + $0x1c] sm:$0x8]
        %v400 = vunpack.c.l.bf16 %v392
        %v401 = vunpack.c.l.bf16 %v393
        %v402 = vunpack.c.l.bf16 %v394
        %v403 = vunpack.c.l.bf16 %v395
        %v404 = vunpack.c.l.bf16 %v396
        %v405 = vunpack.c.l.bf16 %v397
        %v406 = vunpack.c.l.bf16 %v398
        %v407 = vunpack.c.l.bf16 %v399
        %v416 = vrot.slane %v400, 6
        %v417 = vrot.slane %v401, 6
        %v418 = vrot.slane %v402, 6
        %v419 = vrot.slane %v403, 6
        %v420 = vrot.slane %v404, 6
        %v421 = vrot.slane %v405, 6
        %v422 = vrot.slane %v406, 6
        %v423 = vrot.slane %v407, 6
        %424 = vrot.lane.b32.xlu0 %v416, 32
        %v425 = vpop.permute.xlu0 %424
        %426 = vrot.lane.b32.xlu0 %v417, 32
        %v427 = vpop.permute.xlu0 %426
        %428 = vrot.lane.b32.xlu0 %v418, 32
        %v429 = vpop.permute.xlu0 %428
        %430 = vrot.lane.b32.xlu0 %v419, 32
        %v431 = vpop.permute.xlu0 %430
        %432 = vrot.lane.b32.xlu0 %v420, 32
        %v433 = vpop.permute.xlu0 %432
        %434 = vrot.lane.b32.xlu0 %v421, 32
        %v435 = vpop.permute.xlu0 %434
        %436 = vrot.lane.b32.xlu0 %v422, 32
        %v437 = vpop.permute.xlu0 %436
        %438 = vrot.lane.b32.xlu0 %v423, 32
        %v439 = vpop.permute.xlu0 %438
        %vm448 = vcmask 517376
        %449 = vst.msk [vmem:[#allocation2 + $0x8] sm:$0x3] %vm448, %v425
        %450 = vst.msk [vmem:[#allocation2 + $0x20] sm:$0x3] %vm448, %v427
        %451 = vst.msk [vmem:[#allocation2 + $0x38] sm:$0x3] %vm448, %v429
        %452 = vst.msk [vmem:[#allocation2 + $0x50] sm:$0x3] %vm448, %v431
        %453 = vst.msk [vmem:[#allocation2 + $0x68] sm:$0x3] %vm448, %v433
        %454 = vst.msk [vmem:[#allocation2 + $0x80] sm:$0x3] %vm448, %v435
        %455 = vst.msk [vmem:[#allocation2 + $0x98] sm:$0x3] %vm448, %v437
        %456 = vst.msk [vmem:[#allocation2 + $0xb0] sm:$0x3] %vm448, %v439
        %s457 = scalar_lea.vmem %s202, 24 [#allocation3]
        %v458 = vld [vmem:[%s457] sm:$0x1]
        %v459 = vld [vmem:[%s457 + $0x4] sm:$0x1]
        %v460 = vunpack.c.l.bf16 %v458
        %v461 = vunpack.c.l.bf16 %v459
        %v464 = vrot.slane %v460, 2
        %v465 = vrot.slane %v461, 2
        %466 = vrot.lane.b32.xlu0 %v464, 64
        %v467 = vpop.permute.xlu0 %466
        %468 = vrot.lane.b32.xlu0 %v465, 64
        %v469 = vpop.permute.xlu0 %468
        %vm472 = vcmask 785926
        %473 = vst.msk [vmem:[#allocation2 + $0x8] sm:$0xc0] %vm472, %v467
        %474 = vst.msk [vmem:[#allocation2 + $0x20] sm:$0xc0] %vm472, %v469
        %v475 = vld [vmem:[%s457] sm:$0xf]
        %v476 = vld [vmem:[%s457 + $0x4] sm:$0xf]
        %v477 = vunpack.c.l.bf16 %v475
        %v478 = vunpack.c.l.bf16 %v476
        %481 = vrot.lane.b32.xlu0 %v477, 96
        %v482 = vpop.permute.xlu0 %481
        %483 = vrot.lane.b32.xlu0 %v478, 96
        %v484 = vpop.permute.xlu0 %483
        %vm487 = vcmask 1048320
        %488 = vst.msk [vmem:[#allocation2 + $0x8] sm:$0xff] %vm487, %v482
        %489 = vst.msk [vmem:[#allocation2 + $0x20] sm:$0xff] %vm487, %v484
        %v490 = vld [vmem:[%s457] sm:$0x8]
        %v491 = vld [vmem:[%s457 + $0x4] sm:$0x8]
        %v492 = vunpack.c.l.bf16 %v490
        %v493 = vunpack.c.l.bf16 %v491
        %v496 = vrot.slane %v492, 6
        %v497 = vrot.slane %v493, 6
        %vm500 = vcmask 254976
        %501 = vst.msk [vmem:[#allocation2 + $0x10] sm:$0x3] %vm500, %v496
        %502 = vst.msk [vmem:[#allocation2 + $0x28] sm:$0x3] %vm500, %v497
        %v503 = vld [vmem:[#allocation2] sm:$0xff]
        %v504 = vld [vmem:[#allocation2 + $0x8] sm:$0xff]
        %v505 = vld [vmem:[#allocation2 + $0x10] sm:$0xff]
        %v506 = vld [vmem:[#allocation2 + $0x18] sm:$0xff]
        %v507 = vld [vmem:[#allocation2 + $0x20] sm:$0xff]
        %v508 = vld [vmem:[#allocation2 + $0x28] sm:$0xff]
        %v509 = vld [vmem:[#allocation2 + $0x30] sm:$0xff]
        %v510 = vld [vmem:[#allocation2 + $0x38] sm:$0xff]
        %v511 = vld [vmem:[#allocation2 + $0x40] sm:$0xff]
        %v512 = vld [vmem:[#allocation2 + $0x48] sm:$0xff]
        %v513 = vld [vmem:[#allocation2 + $0x50] sm:$0xff]
        %v514 = vld [vmem:[#allocation2 + $0x58] sm:$0xff]
        %v515 = vld [vmem:[#allocation2 + $0x60] sm:$0xff]
        %v516 = vld [vmem:[#allocation2 + $0x68] sm:$0xff]
        %v517 = vld [vmem:[#allocation2 + $0x70] sm:$0xff]
        %v518 = vld [vmem:[#allocation2 + $0x78] sm:$0xff]
        %v519 = vld [vmem:[#allocation2 + $0x80] sm:$0xff]
        %v520 = vld [vmem:[#allocation2 + $0x88] sm:$0xff]
        %v521 = vld [vmem:[#allocation2 + $0x90] sm:$0xff]
        %v522 = vld [vmem:[#allocation2 + $0x98] sm:$0xff]
        %v523 = vld [vmem:[#allocation2 + $0xa0] sm:$0xff]
        %v524 = vld [vmem:[#allocation2 + $0xa8] sm:$0xff]
        %v525 = vld [vmem:[#allocation2 + $0xb0] sm:$0xff]
        %v526 = vld [vmem:[#allocation2 + $0xb8] sm:$0xff]
        %v527 = vpack.c.bf16 %v506, %v503
        %v528 = vpack.c.bf16 %v507, %v504
        %v529 = vpack.c.bf16 %v508, %v505
        %v530 = vpack.c.bf16 %v512, %v509
        %v531 = vpack.c.bf16 %v513, %v510
        %v532 = vpack.c.bf16 %v514, %v511
        %v533 = vpack.c.bf16 %v518, %v515
        %v534 = vpack.c.bf16 %v519, %v516
        %v535 = vpack.c.bf16 %v520, %v517
        %v536 = vpack.c.bf16 %v524, %v521
        %v537 = vpack.c.bf16 %v525, %v522
        %v538 = vpack.c.bf16 %v526, %v523
        %v539 = vld [vmem:[#allocation6] sm:$0xf]
        %v540 = vld [vmem:[#allocation6 + $0x4] sm:$0xf]
        %v541 = vld [vmem:[#allocation6 + $0x8] sm:$0xf]
        %v542 = vld [vmem:[#allocation6 + $0xc] sm:$0xf]
        %v543 = vld [vmem:[#allocation6 + $0x10] sm:$0xf]
        %v544 = vld [vmem:[#allocation6 + $0x14] sm:$0xf]
        %v545 = vld [vmem:[#allocation6 + $0x18] sm:$0xf]
        %v546 = vld [vmem:[#allocation6 + $0x1c] sm:$0xf]
        %v547 = vld [vmem:[#allocation6 + $0x20] sm:$0xf]
        %v548 = vld [vmem:[#allocation6 + $0x24] sm:$0xf]
        %v549 = vld [vmem:[#allocation6 + $0x28] sm:$0xf]
        %v550 = vld [vmem:[#allocation6 + $0x2c] sm:$0xf]
        %v551 = vld [vmem:[#allocation6 + $0x30] sm:$0xf]
        %v552 = vld [vmem:[#allocation6 + $0x34] sm:$0xf]
        %v553 = vld [vmem:[#allocation6 + $0x38] sm:$0xf]
        %v554 = vld [vmem:[#allocation6 + $0x3c] sm:$0xf]
        %v555 = vld [vmem:[#allocation6 + $0x40] sm:$0xf]
        %v556 = vld [vmem:[#allocation6 + $0x44] sm:$0xf]
        %v557 = vld [vmem:[#allocation6 + $0x48] sm:$0xf]
        %v558 = vld [vmem:[#allocation6 + $0x4c] sm:$0xf]
        %v559 = vld [vmem:[#allocation6 + $0x50] sm:$0xf]
        %v560 = vld [vmem:[#allocation6 + $0x54] sm:$0xf]
        %v561 = vld [vmem:[#allocation6 + $0x58] sm:$0xf]
        %v562 = vld [vmem:[#allocation6 + $0x5c] sm:$0xf]
        %v563 = vld [vmem:[#allocation6 + $0x60] sm:$0xf]
        %v564 = vld [vmem:[#allocation6 + $0x64] sm:$0xf]
        %v565 = vld [vmem:[#allocation6 + $0x68] sm:$0xf]
        %v566 = vld [vmem:[#allocation6 + $0x6c] sm:$0xf]
        %v567 = vld [vmem:[#allocation6 + $0x70] sm:$0xf]
        %v568 = vld [vmem:[#allocation6 + $0x74] sm:$0xf]
        %v569 = vld [vmem:[#allocation6 + $0x78] sm:$0xf]
        %v570 = vld [vmem:[#allocation6 + $0x7c] sm:$0xf]
        %v571 = vld [vmem:[#allocation6 + $0x80] sm:$0xf]
        %v572 = vld [vmem:[#allocation6 + $0x84] sm:$0xf]
        %v573 = vld [vmem:[#allocation6 + $0x88] sm:$0xf]
        %v574 = vld [vmem:[#allocation6 + $0x8c] sm:$0xf]
        %v575 = vld [vmem:[%s2] sm:$0x1]
        %v577 = vlaneseq
        %v578 = vshrl.u32 %v577, 7
        %v579 = vsub.s32 0, %v578
        %v580 = vrot.slane %v575, %v579
        %v618 = vunpack.c.l.b16 %v539
        %v619 = vunpack.c.l.b16 %v540
        %v620 = vunpack.c.l.b16 %v541
        %v621 = vunpack.c.l.b16 %v542
        %v622 = vunpack.c.l.b16 %v543
        %v623 = vunpack.c.l.b16 %v544
        %v624 = vunpack.c.l.b16 %v545
        %v625 = vunpack.c.l.b16 %v546
        %v626 = vunpack.c.l.b16 %v547
        %v627 = vunpack.c.l.b16 %v548
        %v628 = vunpack.c.l.b16 %v549
        %v629 = vunpack.c.l.b16 %v550
        %v630 = vunpack.c.l.b16 %v551
        %v631 = vunpack.c.l.b16 %v552
        %v632 = vunpack.c.l.b16 %v553
        %v633 = vunpack.c.l.b16 %v554
        %v634 = vunpack.c.l.b16 %v555
        %v635 = vunpack.c.l.b16 %v556
        %v636 = vunpack.c.l.b16 %v557
        %v637 = vunpack.c.l.b16 %v558
        %v638 = vunpack.c.l.b16 %v559
        %v639 = vunpack.c.l.b16 %v560
        %v640 = vunpack.c.l.b16 %v561
        %v641 = vunpack.c.l.b16 %v562
        %v642 = vunpack.c.l.b16 %v563
        %v643 = vunpack.c.l.b16 %v564
        %v644 = vunpack.c.l.b16 %v565
        %v645 = vunpack.c.l.b16 %v566
        %v646 = vunpack.c.l.b16 %v567
        %v647 = vunpack.c.l.b16 %v568
        %v648 = vunpack.c.l.b16 %v569
        %v649 = vunpack.c.l.b16 %v570
        %v650 = vunpack.c.l.b16 %v571
        %v651 = vunpack.c.l.b16 %v572
        %v652 = vunpack.c.l.b16 %v573
        %v653 = vunpack.c.l.b16 %v574
        %v654 = vpack.c.b16 %v619, %v618
        %v655 = vpack.c.b16 %v621, %v620
        %v656 = vpack.c.b16 %v623, %v622
        %v657 = vpack.c.b16 %v625, %v624
        %v658 = vpack.c.b16 %v627, %v626
        %v659 = vpack.c.b16 %v629, %v628
        %v660 = vpack.c.b16 %v631, %v630
        %v661 = vpack.c.b16 %v633, %v632
        %v662 = vpack.c.b16 %v635, %v634
        %v663 = vpack.c.b16 %v637, %v636
        %v664 = vpack.c.b16 %v639, %v638
        %v665 = vpack.c.b16 %v641, %v640
        %v666 = vpack.c.b16 %v643, %v642
        %v667 = vpack.c.b16 %v645, %v644
        %v668 = vpack.c.b16 %v647, %v646
        %v669 = vpack.c.b16 %v649, %v648
        %v670 = vpack.c.b16 %v651, %v650
        %v671 = vpack.c.b16 %v653, %v652
        %v691 = vsel %vm234, %v529, 0
        %v694 = vsel %vm234, %v532, 0
        %v697 = vsel %vm234, %v535, 0
        %v700 = vsel %vm234, %v538, 0
        %702 = vmatprep.subr.bf16.mxu0 0
        %703 = vmatpush1.bf16.msra.mxu0 %v654
        %704 = vmatprep.subr.bf16.mxu0 0
        %705 = vmatpush1.bf16.msra.mxu0 %v655
        %706 = vmatprep.subr.bf16.mxu0 0
        %707 = vmatpush1.bf16.msra.mxu0 %v656
        %708 = vmatprep.subr.bf16.mxu0 0
        %709 = vmatpush1.bf16.msra.mxu0 %v657
        %710 = vmatprep.subr.bf16.mxu0 0
        %711 = vmatpush1.bf16.msra.mxu0 %v658
        %712 = vmatprep.subr.bf16.mxu0 0
        %713 = vmatpush1.bf16.msra.mxu0 %v659
        %714 = vmatprep.subr.bf16.mxu0 0
        %715 = vmatpush1.bf16.msra.mxu0 %v660
        %716 = vmatprep.subr.bf16.mxu0 0
        %717 = vmatpush1.bf16.msra.mxu0 %v661
        %718 = vmatprep.subr.bf16.mxu0 0
        %719 = vmatpush1.bf16.msra.mxu0 %v662
        %720 = vmatprep.subr.bf16.mxu0 0
        %721 = vmatpush1.bf16.msra.mxu0 %v663
        %722 = vmatprep.subr.bf16.mxu0 0
        %723 = vmatpush1.bf16.msra.mxu0 %v664
        %724 = vmatprep.subr.bf16.mxu0 0
        %725 = vmatpush1.bf16.msra.mxu0 %v665
        %726 = vmatprep.subr.bf16.mxu0 0
        %727 = vmatpush1.bf16.msra.mxu0 %v666
        %728 = vmatprep.subr.bf16.mxu0 0
        %729 = vmatpush1.bf16.msra.mxu0 %v667
        %730 = vmatprep.subr.bf16.mxu0 0
        %731 = vmatpush1.bf16.msra.mxu0 %v668
        %732 = vmatprep.subr.bf16.mxu0 0
        %733 = vmatpush1.bf16.msra.mxu0 %v669
        %734 = vmatprep.mubr.bf16.mxu0 %v528
        %735 = vmatmul.mubr.bf16.gmra.mrb[0].mxu0 %v527
        %v736 = vpop.f32.mrb[0].mxu0
        %v737 = vadd.f32 %v580, %v736
        %v738 = vpop.f32.mrb[0].mxu0
        %v739 = vpop.f32.mrb[0].mxu0
        %v740 = vadd.f32 %v580, %v739
        %v741 = vpop.f32.mrb[0].mxu0
        %742 = vmatprep.mubr.bf16.mxu0 %v531
        %743 = vmatmul.mubr.bf16.gmra.mrb[0].mxu0 %v530
        %v744 = vpop.f32.mrb[0].mxu0
        %v745 = vadd.f32 %v580, %v744
        %v746 = vpop.f32.mrb[0].mxu0
        %v747 = vpop.f32.mrb[0].mxu0
        %v748 = vadd.f32 %v580, %v747
        %v749 = vpop.f32.mrb[0].mxu0
        %750 = vmatprep.mubr.bf16.mxu0 %v534
        %751 = vmatmul.mubr.bf16.gmra.mrb[0].mxu0 %v533
        %v752 = vpop.f32.mrb[0].mxu0
        %v753 = vadd.f32 %v580, %v752
        %v754 = vpop.f32.mrb[0].mxu0
        %v755 = vpop.f32.mrb[0].mxu0
        %v756 = vadd.f32 %v580, %v755
        %v757 = vpop.f32.mrb[0].mxu0
        %758 = vmatprep.mubr.bf16.mxu0 %v537
        %759 = vmatmul.mubr.bf16.gmra.mrb[0].mxu0 %v536
        %v760 = vpop.f32.mrb[0].mxu0
        %v761 = vadd.f32 %v580, %v760
        %v762 = vpop.f32.mrb[0].mxu0
        %v763 = vpop.f32.mrb[0].mxu0
        %v764 = vadd.f32 %v580, %v763
        %v765 = vpop.f32.mrb[0].mxu0
        %766 = vdwg.mxu0
        %767 = vmatprep.subr.bf16.mxu0 0
        %768 = vmatpush1.bf16.msra.mxu0 %v670
        %769 = vmatprep.subr.bf16.mxu0 0
        %770 = vmatpush1.bf16.msra.mxu0 %v671
        %771 = vmatprep.subr.bf16.mxu0 0
        %772 = vmatpush1.bf16.msra.mxu0 0
        %773 = vmatprep.subr.bf16.mxu0 0
        %774 = vmatpush1.bf16.msra.mxu0 0
        %775 = vmatprep.subr.bf16.mxu0 0
        %776 = vmatpush1.bf16.msra.mxu0 0
        %777 = vmatprep.subr.bf16.mxu0 0
        %778 = vmatpush1.bf16.msra.mxu0 0
        %779 = vmatprep.subr.bf16.mxu0 0
        %780 = vmatpush1.bf16.msra.mxu0 0
        %781 = vmatprep.subr.bf16.mxu0 0
        %782 = vmatpush1.bf16.msra.mxu0 0
        %783 = vmatprep.subr.bf16.mxu0 0
        %784 = vmatpush1.bf16.msra.mxu0 0
        %785 = vmatprep.subr.bf16.mxu0 0
        %786 = vmatpush1.bf16.msra.mxu0 0
        %787 = vmatprep.subr.bf16.mxu0 0
        %788 = vmatpush1.bf16.msra.mxu0 0
        %789 = vmatprep.subr.bf16.mxu0 0
        %790 = vmatpush1.bf16.msra.mxu0 0
        %791 = vmatprep.subr.bf16.mxu0 0
        %792 = vmatpush1.bf16.msra.mxu0 0
        %793 = vmatprep.subr.bf16.mxu0 0
        %794 = vmatpush1.bf16.msra.mxu0 0
        %795 = vmatprep.subr.bf16.mxu0 0
        %796 = vmatpush1.bf16.msra.mxu0 0
        %797 = vmatprep.subr.bf16.mxu0 0
        %798 = vmatpush1.bf16.msra.mxu0 0
        %799 = vmatprep.mubr.bf16.mxu0 0
        %800 = vmatmul.mubr.bf16.gmra.mrb[0].mxu0 %v691
        %v801 = vpop.f32.mrb[0].mxu0
        %v802 = vadd.f32 %v737, %v801
        %v803 = vpop.f32.mrb[0].mxu0
        %v804 = vpop.f32.mrb[0].mxu0
        %v805 = vadd.f32 %v740, %v804
        %v806 = vpop.f32.mrb[0].mxu0
        %807 = vmatprep.mubr.bf16.mxu0 0
        %808 = vmatmul.mubr.bf16.gmra.mrb[0].mxu0 %v694
        %v809 = vpop.f32.mrb[0].mxu0
        %v810 = vadd.f32 %v745, %v809
        %v811 = vpop.f32.mrb[0].mxu0
        %v812 = vpop.f32.mrb[0].mxu0
        %v813 = vadd.f32 %v748, %v812
        %v814 = vpop.f32.mrb[0].mxu0
        %815 = vmatprep.mubr.bf16.mxu0 0
        %816 = vmatmul.mubr.bf16.gmra.mrb[0].mxu0 %v697
        %v817 = vpop.f32.mrb[0].mxu0
        %v818 = vadd.f32 %v753, %v817
        %v819 = vpop.f32.mrb[0].mxu0
        %v820 = vpop.f32.mrb[0].mxu0
        %v821 = vadd.f32 %v756, %v820
        %v822 = vpop.f32.mrb[0].mxu0
        %823 = vmatprep.mubr.bf16.mxu0 0
        %824 = vmatmul.mubr.bf16.gmra.mrb[0].mxu0 %v700
        %v825 = vpop.f32.mrb[0].mxu0
        %v826 = vadd.f32 %v761, %v825
        %v827 = vpop.f32.mrb[0].mxu0
        %v828 = vpop.f32.mrb[0].mxu0
        %v829 = vadd.f32 %v764, %v828
        %v830 = vpop.f32.mrb[0].mxu0
        %831 = vdwg.mxu0
        %v832 = vld [vmem:[%s3] sm:$0xff]
        %v833 = vld [vmem:[%s3 + $0x8] sm:$0xff]
        %vm834 = vcmask 64512
        %v836 = vsel %vm834, %v832, 0
        %v839 = vsel %vm834, %v833, 0
        %841 = vmatprep.subr.mxu0 0.0
        %842 = vmatpush1.msra.mxu0 %v802
        %843 = vmatprep.subr.mxu0 0.0
        %844 = vmatpush1.msra.mxu0 0.0
        %845 = vmatprep.subr.mxu0 0.0
        %846 = vmatpush1.msra.mxu0 0.0
        %847 = vmatprep.subr.mxu0 0.0
        %848 = vmatpush1.msra.mxu0 0.0
        %849 = vmatprep.subr.mxu0 0.0
        %850 = vmatpush1.msra.mxu0 0.0
        %851 = vmatprep.subr.mxu0 0.0
        %852 = vmatpush1.msra.mxu0 0.0
        %853 = vmatprep.subr.mxu0 0.0
        %854 = vmatpush1.msra.mxu0 0.0
        %855 = vmatprep.subr.mxu0 0.0
        %856 = vmatpush1.msra.mxu0 0.0
        %857 = vmatprep.subr.mxu0 0.0
        %858 = vmatpush1.msra.mxu0 0.0
        %859 = vmatprep.subr.mxu0 0.0
        %860 = vmatpush1.msra.mxu0 0.0
        %861 = vmatprep.subr.mxu0 0.0
        %862 = vmatpush1.msra.mxu0 0.0
        %863 = vmatprep.subr.mxu0 0.0
        %864 = vmatpush1.msra.mxu0 0.0
        %865 = vmatprep.subr.mxu0 0.0
        %866 = vmatpush1.msra.mxu0 0.0
        %867 = vmatprep.subr.mxu0 0.0
        %868 = vmatpush1.msra.mxu0 0.0
        %869 = vmatprep.subr.mxu0 0.0
        %870 = vmatpush1.msra.mxu0 0.0
        %871 = vmatprep.subr.mxu0 0.0
        %872 = vmatpush1.msra.mxu0 0.0
        %873 = vmatprep.subr.mxu0 0.0
        %874 = vmatpush1.msra.mxu0 0.0
        %875 = vmatprep.subr.mxu0 0.0
        %876 = vmatpush1.msra.mxu0 0.0
        %877 = vmatprep.subr.mxu0 0.0
        %878 = vmatpush1.msra.mxu0 0.0
        %879 = vmatprep.subr.mxu0 0.0
        %880 = vmatpush1.msra.mxu0 0.0
        %881 = vmatprep.subr.mxu0 0.0
        %882 = vmatpush1.msra.mxu0 0.0
        %883 = vmatprep.subr.mxu0 0.0
        %884 = vmatpush1.msra.mxu0 0.0
        %885 = vmatprep.subr.mxu0 0.0
        %886 = vmatpush1.msra.mxu0 0.0
        %887 = vmatprep.subr.mxu0 0.0
        %888 = vmatpush1.msra.mxu0 0.0
        %889 = vmatprep.subr.mxu0 0.0
        %890 = vmatpush1.msra.mxu0 0.0
        %891 = vmatprep.subr.mxu0 0.0
        %892 = vmatpush1.msra.mxu0 0.0
        %893 = vmatprep.subr.mxu0 0.0
        %894 = vmatpush1.msra.mxu0 0.0
        %895 = vmatprep.subr.mxu0 0.0
        %896 = vmatpush1.msra.mxu0 0.0
        %897 = vmatprep.subr.mxu0 0.0
        %898 = vmatpush1.msra.mxu0 0.0
        %899 = vmatprep.subr.mxu0 0.0
        %900 = vmatpush1.msra.mxu0 0.0
        %901 = vmatprep.subr.mxu0 0.0
        %902 = vmatpush1.msra.mxu0 0.0
        %903 = vmatprep.subr.mxu0 0.0
        %904 = vmatpush1.msra.mxu0 0.0
        %905 = vmatprep.mubr.f32.mxu0 0.0
        %906 = vmatmul.mubr.f32.gmra.mrb[0].mxu0 %v836
        %v907 = vpop.f32.mrb[0].mxu0
        %v908 = vadd.f32 0.0, %v907
        %v909 = vpop.f32.mrb[0].mxu0
        %910 = vmatprep.mubr.f32.mxu0 0.0
        %911 = vmatmul.mubr.f32.gmra.mrb[0].mxu0 %v839
        %v912 = vpop.f32.mrb[0].mxu0
        %v913 = vadd.f32 0.0, %v912
        %v914 = vpop.f32.mrb[0].mxu0
        %915 = vdwg.mxu0
        %916 = vmatprep.subr.mxu0 0.0
        %917 = vmatpush1.msra.mxu0 %v805
        %918 = vmatprep.subr.mxu0 0.0
        %919 = vmatpush1.msra.mxu0 0.0
        %920 = vmatprep.subr.mxu0 0.0
        %921 = vmatpush1.msra.mxu0 0.0
        %922 = vmatprep.subr.mxu0 0.0
        %923 = vmatpush1.msra.mxu0 0.0
        %924 = vmatprep.subr.mxu0 0.0
        %925 = vmatpush1.msra.mxu0 0.0
        %926 = vmatprep.subr.mxu0 0.0
        %927 = vmatpush1.msra.mxu0 0.0
        %928 = vmatprep.subr.mxu0 0.0
        %929 = vmatpush1.msra.mxu0 0.0
        %930 = vmatprep.subr.mxu0 0.0
        %931 = vmatpush1.msra.mxu0 0.0
        %932 = vmatprep.subr.mxu0 0.0
        %933 = vmatpush1.msra.mxu0 0.0
        %934 = vmatprep.subr.mxu0 0.0
        %935 = vmatpush1.msra.mxu0 0.0
        %936 = vmatprep.subr.mxu0 0.0
        %937 = vmatpush1.msra.mxu0 0.0
        %938 = vmatprep.subr.mxu0 0.0
        %939 = vmatpush1.msra.mxu0 0.0
        %940 = vmatprep.subr.mxu0 0.0
        %941 = vmatpush1.msra.mxu0 0.0
        %942 = vmatprep.subr.mxu0 0.0
        %943 = vmatpush1.msra.mxu0 0.0
        %944 = vmatprep.subr.mxu0 0.0
        %945 = vmatpush1.msra.mxu0 0.0
        %946 = vmatprep.subr.mxu0 0.0
        %947 = vmatpush1.msra.mxu0 0.0
        %948 = vmatprep.subr.mxu0 0.0
        %949 = vmatpush1.msra.mxu0 0.0
        %950 = vmatprep.subr.mxu0 0.0
        %951 = vmatpush1.msra.mxu0 0.0
        %952 = vmatprep.subr.mxu0 0.0
        %953 = vmatpush1.msra.mxu0 0.0
        %954 = vmatprep.subr.mxu0 0.0
        %955 = vmatpush1.msra.mxu0 0.0
        %956 = vmatprep.subr.mxu0 0.0
        %957 = vmatpush1.msra.mxu0 0.0
        %958 = vmatprep.subr.mxu0 0.0
        %959 = vmatpush1.msra.mxu0 0.0
        %960 = vmatprep.subr.mxu0 0.0
        %961 = vmatpush1.msra.mxu0 0.0
        %962 = vmatprep.subr.mxu0 0.0
        %963 = vmatpush1.msra.mxu0 0.0
        %964 = vmatprep.subr.mxu0 0.0
        %965 = vmatpush1.msra.mxu0 0.0
        %966 = vmatprep.subr.mxu0 0.0
        %967 = vmatpush1.msra.mxu0 0.0
        %968 = vmatprep.subr.mxu0 0.0
        %969 = vmatpush1.msra.mxu0 0.0
        %970 = vmatprep.subr.mxu0 0.0
        %971 = vmatpush1.msra.mxu0 0.0
        %972 = vmatprep.subr.mxu0 0.0
        %973 = vmatpush1.msra.mxu0 0.0
        %974 = vmatprep.subr.mxu0 0.0
        %975 = vmatpush1.msra.mxu0 0.0
        %976 = vmatprep.subr.mxu0 0.0
        %977 = vmatpush1.msra.mxu0 0.0
        %978 = vmatprep.subr.mxu0 0.0
        %979 = vmatpush1.msra.mxu0 0.0
        %980 = vmatprep.mubr.f32.mxu0 0.0
        %981 = vmatmul.mubr.f32.gmra.mrb[0].mxu0 %v836
        %v982 = vpop.f32.mrb[0].mxu0
        %v983 = vadd.f32 0.0, %v982
        %v984 = vpop.f32.mrb[0].mxu0
        %985 = vmatprep.mubr.f32.mxu0 0.0
        %986 = vmatmul.mubr.f32.gmra.mrb[0].mxu0 %v839
        %v987 = vpop.f32.mrb[0].mxu0
        %v988 = vadd.f32 0.0, %v987
        %v989 = vpop.f32.mrb[0].mxu0
        %990 = vdwg.mxu0
        %991 = vmatprep.subr.mxu0 0.0
        %992 = vmatpush1.msra.mxu0 %v810
        %993 = vmatprep.subr.mxu0 0.0
        %994 = vmatpush1.msra.mxu0 0.0
        %995 = vmatprep.subr.mxu0 0.0
        %996 = vmatpush1.msra.mxu0 0.0
        %997 = vmatprep.subr.mxu0 0.0
        %998 = vmatpush1.msra.mxu0 0.0
        %999 = vmatprep.subr.mxu0 0.0
        %1000 = vmatpush1.msra.mxu0 0.0
        %1001 = vmatprep.subr.mxu0 0.0
        %1002 = vmatpush1.msra.mxu0 0.0
        %1003 = vmatprep.subr.mxu0 0.0
        %1004 = vmatpush1.msra.mxu0 0.0
        %1005 = vmatprep.subr.mxu0 0.0
        %1006 = vmatpush1.msra.mxu0 0.0
        %1007 = vmatprep.subr.mxu0 0.0
        %1008 = vmatpush1.msra.mxu0 0.0
        %1009 = vmatprep.subr.mxu0 0.0
        %1010 = vmatpush1.msra.mxu0 0.0
        %1011 = vmatprep.subr.mxu0 0.0
        %1012 = vmatpush1.msra.mxu0 0.0
        %1013 = vmatprep.subr.mxu0 0.0
        %1014 = vmatpush1.msra.mxu0 0.0
        %1015 = vmatprep.subr.mxu0 0.0
        %1016 = vmatpush1.msra.mxu0 0.0
        %1017 = vmatprep.subr.mxu0 0.0
        %1018 = vmatpush1.msra.mxu0 0.0
        %1019 = vmatprep.subr.mxu0 0.0
        %1020 = vmatpush1.msra.mxu0 0.0
        %1021 = vmatprep.subr.mxu0 0.0
        %1022 = vmatpush1.msra.mxu0 0.0
        %1023 = vmatprep.subr.mxu0 0.0
        %1024 = vmatpush1.msra.mxu0 0.0
        %1025 = vmatprep.subr.mxu0 0.0
        %1026 = vmatpush1.msra.mxu0 0.0
        %1027 = vmatprep.subr.mxu0 0.0
        %1028 = vmatpush1.msra.mxu0 0.0
        %1029 = vmatprep.subr.mxu0 0.0
        %1030 = vmatpush1.msra.mxu0 0.0
        %1031 = vmatprep.subr.mxu0 0.0
        %1032 = vmatpush1.msra.mxu0 0.0
        %1033 = vmatprep.subr.mxu0 0.0
        %1034 = vmatpush1.msra.mxu0 0.0
        %1035 = vmatprep.subr.mxu0 0.0
        %1036 = vmatpush1.msra.mxu0 0.0
        %1037 = vmatprep.subr.mxu0 0.0
        %1038 = vmatpush1.msra.mxu0 0.0
        %1039 = vmatprep.subr.mxu0 0.0
        %1040 = vmatpush1.msra.mxu0 0.0
        %1041 = vmatprep.subr.mxu0 0.0
        %1042 = vmatpush1.msra.mxu0 0.0
        %1043 = vmatprep.subr.mxu0 0.0
        %1044 = vmatpush1.msra.mxu0 0.0
        %1045 = vmatprep.subr.mxu0 0.0
        %1046 = vmatpush1.msra.mxu0 0.0
        %1047 = vmatprep.subr.mxu0 0.0
        %1048 = vmatpush1.msra.mxu0 0.0
        %1049 = vmatprep.subr.mxu0 0.0
        %1050 = vmatpush1.msra.mxu0 0.0
        %1051 = vmatprep.subr.mxu0 0.0
        %1052 = vmatpush1.msra.mxu0 0.0
        %1053 = vmatprep.subr.mxu0 0.0
        %1054 = vmatpush1.msra.mxu0 0.0
        %1055 = vmatprep.mubr.f32.mxu0 0.0
        %1056 = vmatmul.mubr.f32.gmra.mrb[0].mxu0 %v836
        %v1057 = vpop.f32.mrb[0].mxu0
        %v1058 = vadd.f32 0.0, %v1057
        %v1059 = vpop.f32.mrb[0].mxu0
        %1060 = vmatprep.mubr.f32.mxu0 0.0
        %1061 = vmatmul.mubr.f32.gmra.mrb[0].mxu0 %v839
        %v1062 = vpop.f32.mrb[0].mxu0
        %v1063 = vadd.f32 0.0, %v1062
        %v1064 = vpop.f32.mrb[0].mxu0
        %1065 = vdwg.mxu0
        %1066 = vmatprep.subr.mxu0 0.0
        %1067 = vmatpush1.msra.mxu0 %v813
        %1068 = vmatprep.subr.mxu0 0.0
        %1069 = vmatpush1.msra.mxu0 0.0
        %1070 = vmatprep.subr.mxu0 0.0
        %1071 = vmatpush1.msra.mxu0 0.0
        %1072 = vmatprep.subr.mxu0 0.0
        %1073 = vmatpush1.msra.mxu0 0.0
        %1074 = vmatprep.subr.mxu0 0.0
        %1075 = vmatpush1.msra.mxu0 0.0
        %1076 = vmatprep.subr.mxu0 0.0
        %1077 = vmatpush1.msra.mxu0 0.0
        %1078 = vmatprep.subr.mxu0 0.0
        %1079 = vmatpush1.msra.mxu0 0.0
        %1080 = vmatprep.subr.mxu0 0.0
        %1081 = vmatpush1.msra.mxu0 0.0
        %1082 = vmatprep.subr.mxu0 0.0
        %1083 = vmatpush1.msra.mxu0 0.0
        %1084 = vmatprep.subr.mxu0 0.0
        %1085 = vmatpush1.msra.mxu0 0.0
        %1086 = vmatprep.subr.mxu0 0.0
        %1087 = vmatpush1.msra.mxu0 0.0
        %1088 = vmatprep.subr.mxu0 0.0
        %1089 = vmatpush1.msra.mxu0 0.0
        %1090 = vmatprep.subr.mxu0 0.0
        %1091 = vmatpush1.msra.mxu0 0.0
        %1092 = vmatprep.subr.mxu0 0.0
        %1093 = vmatpush1.msra.mxu0 0.0
        %1094 = vmatprep.subr.mxu0 0.0
        %1095 = vmatpush1.msra.mxu0 0.0
        %1096 = vmatprep.subr.mxu0 0.0
        %1097 = vmatpush1.msra.mxu0 0.0
        %1098 = vmatprep.subr.mxu0 0.0
        %1099 = vmatpush1.msra.mxu0 0.0
        %1100 = vmatprep.subr.mxu0 0.0
        %1101 = vmatpush1.msra.mxu0 0.0
        %1102 = vmatprep.subr.mxu0 0.0
        %1103 = vmatpush1.msra.mxu0 0.0
        %1104 = vmatprep.subr.mxu0 0.0
        %1105 = vmatpush1.msra.mxu0 0.0
        %1106 = vmatprep.subr.mxu0 0.0
        %1107 = vmatpush1.msra.mxu0 0.0
        %1108 = vmatprep.subr.mxu0 0.0
        %1109 = vmatpush1.msra.mxu0 0.0
        %1110 = vmatprep.subr.mxu0 0.0
        %1111 = vmatpush1.msra.mxu0 0.0
        %1112 = vmatprep.subr.mxu0 0.0
        %1113 = vmatpush1.msra.mxu0 0.0
        %1114 = vmatprep.subr.mxu0 0.0
        %1115 = vmatpush1.msra.mxu0 0.0
        %1116 = vmatprep.subr.mxu0 0.0
        %1117 = vmatpush1.msra.mxu0 0.0
        %1118 = vmatprep.subr.mxu0 0.0
        %1119 = vmatpush1.msra.mxu0 0.0
        %1120 = vmatprep.subr.mxu0 0.0
        %1121 = vmatpush1.msra.mxu0 0.0
        %1122 = vmatprep.subr.mxu0 0.0
        %1123 = vmatpush1.msra.mxu0 0.0
        %1124 = vmatprep.subr.mxu0 0.0
        %1125 = vmatpush1.msra.mxu0 0.0
        %1126 = vmatprep.subr.mxu0 0.0
        %1127 = vmatpush1.msra.mxu0 0.0
        %1128 = vmatprep.subr.mxu0 0.0
        %1129 = vmatpush1.msra.mxu0 0.0
        %1130 = vmatprep.mubr.f32.mxu0 0.0
        %1131 = vmatmul.mubr.f32.gmra.mrb[0].mxu0 %v836
        %v1132 = vpop.f32.mrb[0].mxu0
        %v1133 = vadd.f32 0.0, %v1132
        %v1134 = vpop.f32.mrb[0].mxu0
        %1135 = vmatprep.mubr.f32.mxu0 0.0
        %1136 = vmatmul.mubr.f32.gmra.mrb[0].mxu0 %v839
        %v1137 = vpop.f32.mrb[0].mxu0
        %v1138 = vadd.f32 0.0, %v1137
        %v1139 = vpop.f32.mrb[0].mxu0
        %1140 = vdwg.mxu0
        %1141 = vmatprep.subr.mxu0 0.0
        %1142 = vmatpush1.msra.mxu0 %v818
        %1143 = vmatprep.subr.mxu0 0.0
        %1144 = vmatpush1.msra.mxu0 0.0
        %1145 = vmatprep.subr.mxu0 0.0
        %1146 = vmatpush1.msra.mxu0 0.0
        %1147 = vmatprep.subr.mxu0 0.0
        %1148 = vmatpush1.msra.mxu0 0.0
        %1149 = vmatprep.subr.mxu0 0.0
        %1150 = vmatpush1.msra.mxu0 0.0
        %1151 = vmatprep.subr.mxu0 0.0
        %1152 = vmatpush1.msra.mxu0 0.0
        %1153 = vmatprep.subr.mxu0 0.0
        %1154 = vmatpush1.msra.mxu0 0.0
        %1155 = vmatprep.subr.mxu0 0.0
        %1156 = vmatpush1.msra.mxu0 0.0
        %1157 = vmatprep.subr.mxu0 0.0
        %1158 = vmatpush1.msra.mxu0 0.0
        %1159 = vmatprep.subr.mxu0 0.0
        %1160 = vmatpush1.msra.mxu0 0.0
        %1161 = vmatprep.subr.mxu0 0.0
        %1162 = vmatpush1.msra.mxu0 0.0
        %1163 = vmatprep.subr.mxu0 0.0
        %1164 = vmatpush1.msra.mxu0 0.0
        %1165 = vmatprep.subr.mxu0 0.0
        %1166 = vmatpush1.msra.mxu0 0.0
        %1167 = vmatprep.subr.mxu0 0.0
        %1168 = vmatpush1.msra.mxu0 0.0
        %1169 = vmatprep.subr.mxu0 0.0
        %1170 = vmatpush1.msra.mxu0 0.0
        %1171 = vmatprep.subr.mxu0 0.0
        %1172 = vmatpush1.msra.mxu0 0.0
        %1173 = vmatprep.subr.mxu0 0.0
        %1174 = vmatpush1.msra.mxu0 0.0
        %1175 = vmatprep.subr.mxu0 0.0
        %1176 = vmatpush1.msra.mxu0 0.0
        %1177 = vmatprep.subr.mxu0 0.0
        %1178 = vmatpush1.msra.mxu0 0.0
        %1179 = vmatprep.subr.mxu0 0.0
        %1180 = vmatpush1.msra.mxu0 0.0
        %1181 = vmatprep.subr.mxu0 0.0
        %1182 = vmatpush1.msra.mxu0 0.0
        %1183 = vmatprep.subr.mxu0 0.0
        %1184 = vmatpush1.msra.mxu0 0.0
        %1185 = vmatprep.subr.mxu0 0.0
        %1186 = vmatpush1.msra.mxu0 0.0
        %1187 = vmatprep.subr.mxu0 0.0
        %1188 = vmatpush1.msra.mxu0 0.0
        %1189 = vmatprep.subr.mxu0 0.0
        %1190 = vmatpush1.msra.mxu0 0.0
        %1191 = vmatprep.subr.mxu0 0.0
        %1192 = vmatpush1.msra.mxu0 0.0
        %1193 = vmatprep.subr.mxu0 0.0
        %1194 = vmatpush1.msra.mxu0 0.0
        %1195 = vmatprep.subr.mxu0 0.0
        %1196 = vmatpush1.msra.mxu0 0.0
        %1197 = vmatprep.subr.mxu0 0.0
        %1198 = vmatpush1.msra.mxu0 0.0
        %1199 = vmatprep.subr.mxu0 0.0
        %1200 = vmatpush1.msra.mxu0 0.0
        %1201 = vmatprep.subr.mxu0 0.0
        %1202 = vmatpush1.msra.mxu0 0.0
        %1203 = vmatprep.subr.mxu0 0.0
        %1204 = vmatpush1.msra.mxu0 0.0
        %1205 = vmatprep.mubr.f32.mxu0 0.0
        %1206 = vmatmul.mubr.f32.gmra.mrb[0].mxu0 %v836
        %v1207 = vpop.f32.mrb[0].mxu0
        %v1208 = vadd.f32 0.0, %v1207
        %v1209 = vpop.f32.mrb[0].mxu0
        %1210 = vmatprep.mubr.f32.mxu0 0.0
        %1211 = vmatmul.mubr.f32.gmra.mrb[0].mxu0 %v839
        %v1212 = vpop.f32.mrb[0].mxu0
        %v1213 = vadd.f32 0.0, %v1212
        %v1214 = vpop.f32.mrb[0].mxu0
        %1215 = vdwg.mxu0
        %1216 = vmatprep.subr.mxu0 0.0
        %1217 = vmatpush1.msra.mxu0 %v821
        %1218 = vmatprep.subr.mxu0 0.0
        %1219 = vmatpush1.msra.mxu0 0.0
        %1220 = vmatprep.subr.mxu0 0.0
        %1221 = vmatpush1.msra.mxu0 0.0
        %1222 = vmatprep.subr.mxu0 0.0
        %1223 = vmatpush1.msra.mxu0 0.0
        %1224 = vmatprep.subr.mxu0 0.0
        %1225 = vmatpush1.msra.mxu0 0.0
        %1226 = vmatprep.subr.mxu0 0.0
        %1227 = vmatpush1.msra.mxu0 0.0
        %1228 = vmatprep.subr.mxu0 0.0
        %1229 = vmatpush1.msra.mxu0 0.0
        %1230 = vmatprep.subr.mxu0 0.0
        %1231 = vmatpush1.msra.mxu0 0.0
        %1232 = vmatprep.subr.mxu0 0.0
        %1233 = vmatpush1.msra.mxu0 0.0
        %1234 = vmatprep.subr.mxu0 0.0
        %1235 = vmatpush1.msra.mxu0 0.0
        %1236 = vmatprep.subr.mxu0 0.0
        %1237 = vmatpush1.msra.mxu0 0.0
        %1238 = vmatprep.subr.mxu0 0.0
        %1239 = vmatpush1.msra.mxu0 0.0
        %1240 = vmatprep.subr.mxu0 0.0
        %1241 = vmatpush1.msra.mxu0 0.0
        %1242 = vmatprep.subr.mxu0 0.0
        %1243 = vmatpush1.msra.mxu0 0.0
        %1244 = vmatprep.subr.mxu0 0.0
        %1245 = vmatpush1.msra.mxu0 0.0
        %1246 = vmatprep.subr.mxu0 0.0
        %1247 = vmatpush1.msra.mxu0 0.0
        %1248 = vmatprep.subr.mxu0 0.0
        %1249 = vmatpush1.msra.mxu0 0.0
        %1250 = vmatprep.subr.mxu0 0.0
        %1251 = vmatpush1.msra.mxu0 0.0
        %1252 = vmatprep.subr.mxu0 0.0
        %1253 = vmatpush1.msra.mxu0 0.0
        %1254 = vmatprep.subr.mxu0 0.0
        %1255 = vmatpush1.msra.mxu0 0.0
        %1256 = vmatprep.subr.mxu0 0.0
        %1257 = vmatpush1.msra.mxu0 0.0
        %1258 = vmatprep.subr.mxu0 0.0
        %1259 = vmatpush1.msra.mxu0 0.0
        %1260 = vmatprep.subr.mxu0 0.0
        %1261 = vmatpush1.msra.mxu0 0.0
        %1262 = vmatprep.subr.mxu0 0.0
        %1263 = vmatpush1.msra.mxu0 0.0
        %1264 = vmatprep.subr.mxu0 0.0
        %1265 = vmatpush1.msra.mxu0 0.0
        %1266 = vmatprep.subr.mxu0 0.0
        %1267 = vmatpush1.msra.mxu0 0.0
        %1268 = vmatprep.subr.mxu0 0.0
        %1269 = vmatpush1.msra.mxu0 0.0
        %1270 = vmatprep.subr.mxu0 0.0
        %1271 = vmatpush1.msra.mxu0 0.0
        %1272 = vmatprep.subr.mxu0 0.0
        %1273 = vmatpush1.msra.mxu0 0.0
        %1274 = vmatprep.subr.mxu0 0.0
        %1275 = vmatpush1.msra.mxu0 0.0
        %1276 = vmatprep.subr.mxu0 0.0
        %1277 = vmatpush1.msra.mxu0 0.0
        %1278 = vmatprep.subr.mxu0 0.0
        %1279 = vmatpush1.msra.mxu0 0.0
        %1280 = vmatprep.mubr.f32.mxu0 0.0
        %1281 = vmatmul.mubr.f32.gmra.mrb[0].mxu0 %v836
        %v1282 = vpop.f32.mrb[0].mxu0
        %v1283 = vadd.f32 0.0, %v1282
        %v1284 = vpop.f32.mrb[0].mxu0
        %1285 = vmatprep.mubr.f32.mxu0 0.0
        %1286 = vmatmul.mubr.f32.gmra.mrb[0].mxu0 %v839
        %v1287 = vpop.f32.mrb[0].mxu0
        %v1288 = vadd.f32 0.0, %v1287
        %v1289 = vpop.f32.mrb[0].mxu0
        %1290 = vdwg.mxu0
        %1291 = vmatprep.subr.mxu0 0.0
        %1292 = vmatpush1.msra.mxu0 %v826
        %1293 = vmatprep.subr.mxu0 0.0
        %1294 = vmatpush1.msra.mxu0 0.0
        %1295 = vmatprep.subr.mxu0 0.0
        %1296 = vmatpush1.msra.mxu0 0.0
        %1297 = vmatprep.subr.mxu0 0.0
        %1298 = vmatpush1.msra.mxu0 0.0
        %1299 = vmatprep.subr.mxu0 0.0
        %1300 = vmatpush1.msra.mxu0 0.0
        %1301 = vmatprep.subr.mxu0 0.0
        %1302 = vmatpush1.msra.mxu0 0.0
        %1303 = vmatprep.subr.mxu0 0.0
        %1304 = vmatpush1.msra.mxu0 0.0
        %1305 = vmatprep.subr.mxu0 0.0
        %1306 = vmatpush1.msra.mxu0 0.0
        %1307 = vmatprep.subr.mxu0 0.0
        %1308 = vmatpush1.msra.mxu0 0.0
        %1309 = vmatprep.subr.mxu0 0.0
        %1310 = vmatpush1.msra.mxu0 0.0
        %1311 = vmatprep.subr.mxu0 0.0
        %1312 = vmatpush1.msra.mxu0 0.0
        %1313 = vmatprep.subr.mxu0 0.0
        %1314 = vmatpush1.msra.mxu0 0.0
        %1315 = vmatprep.subr.mxu0 0.0
        %1316 = vmatpush1.msra.mxu0 0.0
        %1317 = vmatprep.subr.mxu0 0.0
        %1318 = vmatpush1.msra.mxu0 0.0
        %1319 = vmatprep.subr.mxu0 0.0
        %1320 = vmatpush1.msra.mxu0 0.0
        %1321 = vmatprep.subr.mxu0 0.0
        %1322 = vmatpush1.msra.mxu0 0.0
        %1323 = vmatprep.subr.mxu0 0.0
        %1324 = vmatpush1.msra.mxu0 0.0
        %1325 = vmatprep.subr.mxu0 0.0
        %1326 = vmatpush1.msra.mxu0 0.0
        %1327 = vmatprep.subr.mxu0 0.0
        %1328 = vmatpush1.msra.mxu0 0.0
        %1329 = vmatprep.subr.mxu0 0.0
        %1330 = vmatpush1.msra.mxu0 0.0
        %1331 = vmatprep.subr.mxu0 0.0
        %1332 = vmatpush1.msra.mxu0 0.0
        %1333 = vmatprep.subr.mxu0 0.0
        %1334 = vmatpush1.msra.mxu0 0.0
        %1335 = vmatprep.subr.mxu0 0.0
        %1336 = vmatpush1.msra.mxu0 0.0
        %1337 = vmatprep.subr.mxu0 0.0
        %1338 = vmatpush1.msra.mxu0 0.0
        %1339 = vmatprep.subr.mxu0 0.0
        %1340 = vmatpush1.msra.mxu0 0.0
        %1341 = vmatprep.subr.mxu0 0.0
        %1342 = vmatpush1.msra.mxu0 0.0
        %1343 = vmatprep.subr.mxu0 0.0
        %1344 = vmatpush1.msra.mxu0 0.0
        %1345 = vmatprep.subr.mxu0 0.0
        %1346 = vmatpush1.msra.mxu0 0.0
        %1347 = vmatprep.subr.mxu0 0.0
        %1348 = vmatpush1.msra.mxu0 0.0
        %1349 = vmatprep.subr.mxu0 0.0
        %1350 = vmatpush1.msra.mxu0 0.0
        %1351 = vmatprep.subr.mxu0 0.0
        %1352 = vmatpush1.msra.mxu0 0.0
        %1353 = vmatprep.subr.mxu0 0.0
        %1354 = vmatpush1.msra.mxu0 0.0
        %1355 = vmatprep.mubr.f32.mxu0 0.0
        %1356 = vmatmul.mubr.f32.gmra.mrb[0].mxu0 %v836
        %v1357 = vpop.f32.mrb[0].mxu0
        %v1358 = vadd.f32 0.0, %v1357
        %v1359 = vpop.f32.mrb[0].mxu0
        %1360 = vmatprep.mubr.f32.mxu0 0.0
        %1361 = vmatmul.mubr.f32.gmra.mrb[0].mxu0 %v839
        %v1362 = vpop.f32.mrb[0].mxu0
        %v1363 = vadd.f32 0.0, %v1362
        %v1364 = vpop.f32.mrb[0].mxu0
        %1365 = vdwg.mxu0
        %1366 = vmatprep.subr.mxu0 0.0
        %1367 = vmatpush1.msra.mxu0 %v829
        %1368 = vmatprep.subr.mxu0 0.0
        %1369 = vmatpush1.msra.mxu0 0.0
        %1370 = vmatprep.subr.mxu0 0.0
        %1371 = vmatpush1.msra.mxu0 0.0
        %1372 = vmatprep.subr.mxu0 0.0
        %1373 = vmatpush1.msra.mxu0 0.0
        %1374 = vmatprep.subr.mxu0 0.0
        %1375 = vmatpush1.msra.mxu0 0.0
        %1376 = vmatprep.subr.mxu0 0.0
        %1377 = vmatpush1.msra.mxu0 0.0
        %1378 = vmatprep.subr.mxu0 0.0
        %1379 = vmatpush1.msra.mxu0 0.0
        %1380 = vmatprep.subr.mxu0 0.0
        %1381 = vmatpush1.msra.mxu0 0.0
        %1382 = vmatprep.subr.mxu0 0.0
        %1383 = vmatpush1.msra.mxu0 0.0
        %1384 = vmatprep.subr.mxu0 0.0
        %1385 = vmatpush1.msra.mxu0 0.0
        %1386 = vmatprep.subr.mxu0 0.0
        %1387 = vmatpush1.msra.mxu0 0.0
        %1388 = vmatprep.subr.mxu0 0.0
        %1389 = vmatpush1.msra.mxu0 0.0
        %1390 = vmatprep.subr.mxu0 0.0
        %1391 = vmatpush1.msra.mxu0 0.0
        %1392 = vmatprep.subr.mxu0 0.0
        %1393 = vmatpush1.msra.mxu0 0.0
        %1394 = vmatprep.subr.mxu0 0.0
        %1395 = vmatpush1.msra.mxu0 0.0
        %1396 = vmatprep.subr.mxu0 0.0
        %1397 = vmatpush1.msra.mxu0 0.0
        %1398 = vmatprep.subr.mxu0 0.0
        %1399 = vmatpush1.msra.mxu0 0.0
        %1400 = vmatprep.subr.mxu0 0.0
        %1401 = vmatpush1.msra.mxu0 0.0
        %1402 = vmatprep.subr.mxu0 0.0
        %1403 = vmatpush1.msra.mxu0 0.0
        %1404 = vmatprep.subr.mxu0 0.0
        %1405 = vmatpush1.msra.mxu0 0.0
        %1406 = vmatprep.subr.mxu0 0.0
        %1407 = vmatpush1.msra.mxu0 0.0
        %1408 = vmatprep.subr.mxu0 0.0
        %1409 = vmatpush1.msra.mxu0 0.0
        %1410 = vmatprep.subr.mxu0 0.0
        %1411 = vmatpush1.msra.mxu0 0.0
        %1412 = vmatprep.subr.mxu0 0.0
        %1413 = vmatpush1.msra.mxu0 0.0
        %1414 = vmatprep.subr.mxu0 0.0
        %1415 = vmatpush1.msra.mxu0 0.0
        %1416 = vmatprep.subr.mxu0 0.0
        %1417 = vmatpush1.msra.mxu0 0.0
        %1418 = vmatprep.subr.mxu0 0.0
        %1419 = vmatpush1.msra.mxu0 0.0
        %1420 = vmatprep.subr.mxu0 0.0
        %1421 = vmatpush1.msra.mxu0 0.0
        %1422 = vmatprep.subr.mxu0 0.0
        %1423 = vmatpush1.msra.mxu0 0.0
        %1424 = vmatprep.subr.mxu0 0.0
        %1425 = vmatpush1.msra.mxu0 0.0
        %1426 = vmatprep.subr.mxu0 0.0
        %1427 = vmatpush1.msra.mxu0 0.0
        %1428 = vmatprep.subr.mxu0 0.0
        %1429 = vmatpush1.msra.mxu0 0.0
        %1430 = vmatprep.mubr.f32.mxu0 0.0
        %1431 = vmatmul.mubr.f32.gmra.mrb[0].mxu0 %v836
        %v1432 = vpop.f32.mrb[0].mxu0
        %v1433 = vadd.f32 0.0, %v1432
        %v1434 = vpop.f32.mrb[0].mxu0
        %1435 = vmatprep.mubr.f32.mxu0 0.0
        %1436 = vmatmul.mubr.f32.gmra.mrb[0].mxu0 %v839
        %v1437 = vpop.f32.mrb[0].mxu0
        %v1438 = vadd.f32 0.0, %v1437
        %v1439 = vpop.f32.mrb[0].mxu0
        %1440 = vdwg.mxu0
        %v1441 = vmul.f32 %v983, 0.0
        %v1442 = vmul.f32 %v988, 0.0
        %v1443 = vadd.f32 %v908, %v1441
        %v1444 = vadd.f32 %v913, %v1442
        %1445 = vst [vmem:[%s230] sm:$0xff] %v1443
        %1446 = vst [vmem:[%s230 + $0x8] sm:$0xff] %v1444
        %v1447 = vmul.f32 %v908, 0.53333336
        %v1448 = vmul.f32 %v913, 0.53333336
        %v1449 = vmul.f32 %v983, 0.46666667
        %v1450 = vmul.f32 %v988, 0.46666667
        %v1451 = vadd.f32 %v1447, %v1449
        %v1452 = vadd.f32 %v1448, %v1450
        %s1453 = scalar_lea.vmem %s230, 16 [#allocation8]
        %1454 = vst [vmem:[%s1453] sm:$0xff] %v1451
        %1455 = vst [vmem:[%s1453 + $0x8] sm:$0xff] %v1452
        %v1456 = vmul.f32 %v908, 0.06666667
        %v1457 = vmul.f32 %v913, 0.06666667
        %v1458 = vmul.f32 %v983, 0.93333334
        %v1459 = vmul.f32 %v988, 0.93333334
        %v1460 = vadd.f32 %v1456, %v1458
        %v1461 = vadd.f32 %v1457, %v1459
        %s1462 = scalar_lea.vmem %s230, 32 [#allocation8]
        %1463 = vst [vmem:[%s1462] sm:$0xff] %v1460
        %1464 = vst [vmem:[%s1462 + $0x8] sm:$0xff] %v1461
        %v1465 = vmul.f32 %v983, 0.6
        %v1466 = vmul.f32 %v988, 0.6
        %v1467 = vmul.f32 %v1058, 0.4
        %v1468 = vmul.f32 %v1063, 0.4
        %v1469 = vadd.f32 %v1465, %v1467
        %v1470 = vadd.f32 %v1466, %v1468
        %s1471 = scalar_lea.vmem %s230, 48 [#allocation8]
        %1472 = vst [vmem:[%s1471] sm:$0xff] %v1469
        %1473 = vst [vmem:[%s1471 + $0x8] sm:$0xff] %v1470
        %v1474 = vmul.f32 %v983, 0.13333334
        %v1475 = vmul.f32 %v988, 0.13333334
        %v1476 = vmul.f32 %v1058, 0.8666667
        %v1477 = vmul.f32 %v1063, 0.8666667
        %v1478 = vadd.f32 %v1474, %v1476
        %v1479 = vadd.f32 %v1475, %v1477
        %s1480 = scalar_lea.vmem %s230, 64 [#allocation8]
        %1481 = vst [vmem:[%s1480] sm:$0xff] %v1478
        %1482 = vst [vmem:[%s1480 + $0x8] sm:$0xff] %v1479
        %v1483 = vmul.f32 %v1058, 0.6666667
        %v1484 = vmul.f32 %v1063, 0.6666667
        %v1485 = vmul.f32 %v1133, 0.33333334
        %v1486 = vmul.f32 %v1138, 0.33333334
        %v1487 = vadd.f32 %v1483, %v1485
        %v1488 = vadd.f32 %v1484, %v1486
        %s1489 = scalar_lea.vmem %s230, 80 [#allocation8]
        %1490 = vst [vmem:[%s1489] sm:$0xff] %v1487
        %1491 = vst [vmem:[%s1489 + $0x8] sm:$0xff] %v1488
        %v1492 = vmul.f32 %v1058, 0.2
        %v1493 = vmul.f32 %v1063, 0.2
        %v1494 = vmul.f32 %v1133, 0.8
        %v1495 = vmul.f32 %v1138, 0.8
        %v1496 = vadd.f32 %v1492, %v1494
        %v1497 = vadd.f32 %v1493, %v1495
        %s1498 = scalar_lea.vmem %s230, 96 [#allocation8]
        %1499 = vst [vmem:[%s1498] sm:$0xff] %v1496
        %1500 = vst [vmem:[%s1498 + $0x8] sm:$0xff] %v1497
        %v1501 = vmul.f32 %v1133, 0.73333335
        %v1502 = vmul.f32 %v1138, 0.73333335
        %v1503 = vmul.f32 %v1208, 0.26666668
        %v1504 = vmul.f32 %v1213, 0.26666668
        %v1505 = vadd.f32 %v1501, %v1503
        %v1506 = vadd.f32 %v1502, %v1504
        %s1507 = scalar_lea.vmem %s230, 112 [#allocation8]
        %1508 = vst [vmem:[%s1507] sm:$0xff] %v1505
        %1509 = vst [vmem:[%s1507 + $0x8] sm:$0xff] %v1506
        %v1510 = vmul.f32 %v1133, 0.26666668
        %v1511 = vmul.f32 %v1138, 0.26666668
        %v1512 = vmul.f32 %v1208, 0.73333335
        %v1513 = vmul.f32 %v1213, 0.73333335
        %v1514 = vadd.f32 %v1510, %v1512
        %v1515 = vadd.f32 %v1511, %v1513
        %s1516 = scalar_lea.vmem %s230, 128 [#allocation8]
        %1517 = vst [vmem:[%s1516] sm:$0xff] %v1514
        %1518 = vst [vmem:[%s1516 + $0x8] sm:$0xff] %v1515
        %v1519 = vmul.f32 %v1208, 0.8
        %v1520 = vmul.f32 %v1213, 0.8
        %v1521 = vmul.f32 %v1283, 0.2
        %v1522 = vmul.f32 %v1288, 0.2
        %v1523 = vadd.f32 %v1519, %v1521
        %v1524 = vadd.f32 %v1520, %v1522
        %s1525 = scalar_lea.vmem %s230, 144 [#allocation8]
        %1526 = vst [vmem:[%s1525] sm:$0xff] %v1523
        %1527 = vst [vmem:[%s1525 + $0x8] sm:$0xff] %v1524
        %v1528 = vmul.f32 %v1208, 0.33333334
        %v1529 = vmul.f32 %v1213, 0.33333334
        %v1530 = vmul.f32 %v1283, 0.6666667
        %v1531 = vmul.f32 %v1288, 0.6666667
        %v1532 = vadd.f32 %v1528, %v1530
        %v1533 = vadd.f32 %v1529, %v1531
        %s1534 = scalar_lea.vmem %s230, 160 [#allocation8]
        %1535 = vst [vmem:[%s1534] sm:$0xff] %v1532
        %1536 = vst [vmem:[%s1534 + $0x8] sm:$0xff] %v1533
        %v1537 = vmul.f32 %v1283, 0.8666667
        %v1538 = vmul.f32 %v1288, 0.8666667
        %v1539 = vmul.f32 %v1358, 0.13333334
        %v1540 = vmul.f32 %v1363, 0.13333334
        %v1541 = vadd.f32 %v1537, %v1539
        %v1542 = vadd.f32 %v1538, %v1540
        %s1543 = scalar_lea.vmem %s230, 176 [#allocation8]
        %1544 = vst [vmem:[%s1543] sm:$0xff] %v1541
        %1545 = vst [vmem:[%s1543 + $0x8] sm:$0xff] %v1542
        %v1546 = vmul.f32 %v1283, 0.4
        %v1547 = vmul.f32 %v1288, 0.4
        %v1548 = vmul.f32 %v1358, 0.6
        %v1549 = vmul.f32 %v1363, 0.6
        %v1550 = vadd.f32 %v1546, %v1548
        %v1551 = vadd.f32 %v1547, %v1549
        %s1552 = scalar_lea.vmem %s230, 192 [#allocation8]
        %1553 = vst [vmem:[%s1552] sm:$0xff] %v1550
        %1554 = vst [vmem:[%s1552 + $0x8] sm:$0xff] %v1551
        %v1555 = vmul.f32 %v1358, 0.93333334
        %v1556 = vmul.f32 %v1363, 0.93333334
        %v1557 = vmul.f32 %v1433, 0.06666667
        %v1558 = vmul.f32 %v1438, 0.06666667
        %v1559 = vadd.f32 %v1555, %v1557
        %v1560 = vadd.f32 %v1556, %v1558
        %s1561 = scalar_lea.vmem %s230, 208 [#allocation8]
        %1562 = vst [vmem:[%s1561] sm:$0xff] %v1559
        %1563 = vst [vmem:[%s1561 + $0x8] sm:$0xff] %v1560
        %v1564 = vmul.f32 %v1358, 0.46666667
        %v1565 = vmul.f32 %v1363, 0.46666667
        %v1566 = vmul.f32 %v1433, 0.53333336
        %v1567 = vmul.f32 %v1438, 0.53333336
        %v1568 = vadd.f32 %v1564, %v1566
        %v1569 = vadd.f32 %v1565, %v1567
        %s1570 = scalar_lea.vmem %s230, 224 [#allocation8]
        %1571 = vst [vmem:[%s1570] sm:$0xff] %v1568
        %1572 = vst [vmem:[%s1570 + $0x8] sm:$0xff] %v1569
        %v1573 = vmul.f32 %v1433, 0.0
        %v1574 = vmul.f32 %v1438, 0.0
        %v1575 = vadd.f32 %v1433, %v1573
        %v1576 = vadd.f32 %v1438, %v1574
        %s1577 = scalar_lea.vmem %s230, 240 [#allocation8]
        %1578 = vst [vmem:[%s1577] sm:$0xff] %v1575
        %1579 = vst [vmem:[%s1577 + $0x8] sm:$0xff] %v1576
        %s1580 = sand.u32 %s119, 1
        %s1581 = scalar_lea.sflag [#allocation5], %s1580
        %s1582 = sand.u32 %s119, 1
        %s1583 = smul.addr %s1582, 256
        %s1584 = scalar_lea.vmem [#allocation8], %s1583
        // Predicated region
        $region45: #{tpu_custom_call.1} parent=35 // pred_check
          %p1585 = pneg %p129
        $region46: #{tpu_custom_call.1} parent=35 // pred_check_branch
          %1587 = sbr.rel (%p1585) target = $region48
        $region47: #{tpu_custom_call.1} parent=35 // pred_region
          %s1589 = ssub.s32 4096, 4096
          %1590 = vsyncadd %s1581, %s1589
          %s1591 = smul.addr %s22, 32
          %s1592 = smul.addr %s1591, 128
          %s1593 = scalar_lea.hbm %s4, %s1592
          %s1594 = sshll.u32 %s1584, 4
          %s1595 = int_to_ptr.vmem [resolvable:$true] %s1594
          %1600 = dma.vmem_to_hbm [thread:$0]  %s1595, 4096, %s1593, %s1581, 128, 128, 8
        $region48: #{tpu_custom_call.1} parent=35 // pred_fallthru
          _
      $region36: #{tpu_custom_call.1} parent=5 // pred_fallthru
        _
      %p1601 = scmp.le.s32.totalorder 2, %s17
      // Predicated region
      $region49: #{tpu_custom_call.1} parent=5 // pred_check
        %p1602 = pneg %p1601
      $region50: #{tpu_custom_call.1} parent=5 // pred_check_branch
        %1604 = sbr.rel (%p1602) target = $region52
      $region51: #{tpu_custom_call.1} parent=5 // pred_region
        %s1605 = ssub.s32 %s17, 2
        // Predicated region
        $region53: #{tpu_custom_call.1} parent=51 // pred_check
          %p1606 = pneg %p135
        $region54: #{tpu_custom_call.1} parent=51 // pred_check_branch
          %1608 = sbr.rel (%p1606) target = $region56
        $region55: #{tpu_custom_call.1} parent=51 // pred_region
          %s1609 = sand.u32 %s120, 1
          %s1610 = scalar_lea.sflag [#allocation5], %s1609
          %s1611 = sand.u32 %s120, 1
          %s1612 = smul.addr %s1611, 256
          %s1613 = scalar_lea.vmem [#allocation8], %s1612
          %1614 = dma.done %s1610, 4096
        $region56: #{tpu_custom_call.1} parent=51 // pred_fallthru
          _
      $region52: #{tpu_custom_call.1} parent=5 // pred_fallthru
        _
    $region6: #{tpu_custom_call.1} parent=1 // loop_footer
      %s21 = sadd.s32 1, %s17
    $region7: #{tpu_custom_call.1} parent=1 // loop_footer_branch
      %16 = sbr.rel target = $region3
    $region8: #{tpu_custom_call.1} parent=1 // loop_exit
      _
    %1615 = vsyncpa [#allocation4], 1
    %s1616 = scalar_lea.sflag [#allocation4], 1
    %1617 = vsyncpa %s1616, 1
    %1618 = vsyncpa [#allocation7], 1
    %1619 = vsyncpa [#allocation5], 1
    %s1620 = scalar_lea.sflag [#allocation5], 1
    %1621 = vsyncpa %s1620, 1

</llo_original>
